<compile_context>
chip_gen: v7x
topology: tpu7x:2x2x1
jax: 0.10.0
libtpu: 0.0.40
codegen_flags: <defaults>
</compile_context>

<pallas_src>
import functools

import jax
import jax.numpy as jnp
import numpy as np
from jax.experimental import pallas as pl
from jax.experimental.pallas import tpu as pltpu


def _lstm_kernel(x_ref, wih_ref, whh_ref, b_ref, wout_ref, bout_ref,
                 y_ref, hN_ref, cN_ref,
                 gx_sc, hall_sc, h_sc, c_sc,
                 *, t_chunk, b_pad, hidden, seq_len, needs_mask, unroll):
    H = hidden
    chunk = pl.program_id(0)
    n_chunks = pl.num_programs(0)

    # ---- Init persistent h/c carry on the first chunk only.
    @pl.when(chunk == 0)
    def _():
        h_sc[...] = jnp.zeros_like(h_sc)
        c_sc[...] = jnp.zeros_like(c_sc)

    # ---- Phase 1 (off the serial chain): input projection for this chunk.
    # gates_x = x @ W_ih^T + (b_ih + b_hh)  -> (T_chunk*B_pad, 4H), one MXU matmul.
    gx_sc[...] = (jnp.dot(x_ref[...], wih_ref[...],
                          preferred_element_type=jnp.float32)
                  + b_ref[...])

    # ---- Phase 2: serial recurrence; only h_prev @ W_hh^T per step on the MXU.
    def step(t, carry):
        h_prev, c_prev = carry
        r = pl.multiple_of(t * b_pad, b_pad)            # sublane-aligned (b_pad % 8 == 0)
        gates = gx_sc[pl.ds(r, b_pad), :] + jnp.dot(
            h_prev, whh_ref[...], preferred_element_type=jnp.float32)  # (B_pad, 4H)

        # Gate order after wrapper-side permutation: [i, f, o, g].
        # -> one sigmoid over 3H lanes, one tanh over H lanes (2 EUP launches).
        ifo = jax.nn.sigmoid(gates[:, :3 * H])
        g_g = jnp.tanh(gates[:, 3 * H:])
        i_g = ifo[:, :H]
        f_g = ifo[:, H:2 * H]
        o_g = ifo[:, 2 * H:]

        c_new = f_g * c_prev + i_g * g_g
        h_new = o_g * jnp.tanh(c_new)

        if needs_mask:  # static: only emitted when T % T_chunk != 0
            valid = (chunk * t_chunk + t) < seq_len
            h_new = jnp.where(valid, h_new, h_prev)
            c_new = jnp.where(valid, c_new, c_prev)

        hall_sc[pl.ds(r, b_pad), :] = h_new             # stage for batched head matmul
        return h_new, c_new

    h0 = h_sc[...]
    c0 = c_sc[...]
    h_fin, c_fin = jax.lax.fori_loop(0, t_chunk, step, (h0, c0), unroll=unroll)

    # Persist carry for the next chunk.
    h_sc[...] = h_fin
    c_sc[...] = c_fin

    # Final hidden/cell state written exactly once (last chunk).
    @pl.when(chunk == n_chunks - 1)
    def _():
        hN_ref[...] = h_fin
        cN_ref[...] = c_fin

    # ---- Phase 3 (off the serial chain): Linear head for this chunk.
    # y = H_chunk @ W_out^T + b_out  -> (T_chunk*B_pad, F_pad), lane-dense store.
    y_ref[...] = (jnp.dot(hall_sc[...], wout_ref[...],
                          preferred_element_type=jnp.float32)
                  + bout_ref[...]).astype(y_ref.dtype)


def lstm_forward(x, w_ih, w_hh, b_ih, b_hh, w_out, b_out, *, t_chunk=32):
    """x: (seq_len, batch, n_features) float32.  Returns (y, (h_n, c_n))."""
    T, B, F = x.shape
    H = w_hh.shape[1]
    assert w_ih.shape == (4 * H, F)
    assert w_hh.shape == (4 * H, H)
    assert w_out.shape == (F, H)

    # Padding / chunking geometry (all static, layout plumbing only).
    B_pad = max(8, ((B + 7) // 8) * 8)          # sublane-aligned batch
    F_pad = ((F + 127) // 128) * 128            # lane-dense head output
    t_chunk = max(1, min(t_chunk, T))
    num_chunks = (T + t_chunk - 1) // t_chunk
    T_pad = num_chunks * t_chunk
    needs_mask = (T_pad != T)
    rows_per_chunk = t_chunk * B_pad

    # ---- One-time weight layout prep (XLA; runs once, off the recurrence).
    # PyTorch gate order [i, f, g, o] -> reorder rows to [i, f, o, g] so the
    # kernel can do one merged sigmoid + one tanh.
    perm = np.concatenate([np.arange(0, 2 * H),       # i, f
                           np.arange(3 * H, 4 * H),   # o
                           np.arange(2 * H, 3 * H)])  # g
    w_ih_r = jnp.asarray(w_ih, jnp.float32)[perm]
    w_hh_r = jnp.asarray(w_hh, jnp.float32)[perm]
    b_r = (jnp.asarray(b_ih, jnp.float32) + jnp.asarray(b_hh, jnp.float32))[perm]

    wih_t = w_ih_r.T                                   # (F, 4H)
    whh_t = w_hh_r.T                                   # (H, 4H)
    b2 = b_r.reshape(1, 4 * H)                         # (1, 4H)

    # Lane-pad the head so the y store is a full-lane (>=128) store.
    wout_t = jnp.zeros((H, F_pad), jnp.float32).at[:, :F].set(
        jnp.asarray(w_out, jnp.float32).T)             # (H, F_pad)
    bout = jnp.zeros((1, F_pad), jnp.float32).at[:, :F].set(
        jnp.asarray(b_out, jnp.float32))               # (1, F_pad)

    # Pad batch (sublanes) and time (chunk multiple) with zeros; padded batch
    # rows are independent and sliced away, padded time steps are masked.
    x_p = jnp.zeros((T_pad, B_pad, F), jnp.float32).at[:T, :B, :].set(
        x.astype(jnp.float32))
    x2 = x_p.reshape(T_pad * B_pad, F)

    out_shapes = (
        jax.ShapeDtypeStruct((T_pad * B_pad, F_pad), jnp.float32),  # y (padded)
        jax.ShapeDtypeStruct((B_pad, H), jnp.float32),              # h_n (padded)
        jax.ShapeDtypeStruct((B_pad, H), jnp.float32),              # c_n (padded)
    )

    in_specs = [
        pl.BlockSpec((rows_per_chunk, F), lambda c: (c, 0)),        # x chunk
        pl.BlockSpec((F, 4 * H), lambda c: (0, 0)),                 # W_ih^T (resident)
        pl.BlockSpec((H, 4 * H), lambda c: (0, 0)),                 # W_hh^T (resident)
        pl.BlockSpec((1, 4 * H), lambda c: (0, 0)),                 # bias
        pl.BlockSpec((H, F_pad), lambda c: (0, 0)),                 # W_out^T (padded)
        pl.BlockSpec((1, F_pad), lambda c: (0, 0)),                 # b_out (padded)
    ]
    out_specs = (
        pl.BlockSpec((rows_per_chunk, F_pad), lambda c: (c, 0)),    # y chunk
        pl.BlockSpec((B_pad, H), lambda c: (0, 0)),                 # h_n (resident)
        pl.BlockSpec((B_pad, H), lambda c: (0, 0)),                 # c_n (resident)
    )
    scratch_shapes = [
        pltpu.VMEM((rows_per_chunk, 4 * H), jnp.float32),   # staged x-path gates
        pltpu.VMEM((rows_per_chunk, H), jnp.float32),       # staged hidden states
        pltpu.VMEM((B_pad, H), jnp.float32),                # h carry (persistent)
        pltpu.VMEM((B_pad, H), jnp.float32),                # c carry (persistent)
    ]

    # Explicit VMEM budget: per-chunk buffers (x/y double-buffered) + scratch
    # + resident weights, with headroom; clamped to stay within v7x's 64 MiB.
    vmem_bytes = 4 * (
        2 * rows_per_chunk * F
        + 2 * rows_per_chunk * F_pad
        + rows_per_chunk * 4 * H
        + rows_per_chunk * H
        + 6 * B_pad * H
        + F * 4 * H + H * 4 * H + 4 * H + H * F_pad + F_pad
    )
    vmem_limit = int(min(max(4 * vmem_bytes, 16 * 1024 * 1024), 64 * 1024 * 1024))

    kernel = functools.partial(
        _lstm_kernel, t_chunk=t_chunk, b_pad=B_pad, hidden=H, seq_len=T,
        needs_mask=needs_mask, unroll=min(8, t_chunk))

    y2, h_n, c_n = pl.pallas_call(
        kernel,
        out_shape=out_shapes,
        grid_spec=pltpu.PrefetchScalarGridSpec(
            num_scalar_prefetch=0,
            grid=(num_chunks,),
            in_specs=in_specs,
            out_specs=out_specs,
            scratch_shapes=scratch_shapes),
        compiler_params=pltpu.CompilerParams(
            dimension_semantics=("arbitrary",),
            vmem_limit_bytes=vmem_limit),
    )(x2, wih_t, whh_t, b2, wout_t, bout)

    y = y2.reshape(T_pad, B_pad, F_pad)[:T, :B, :F]
    return y, (h_n[:B][None], c_n[:B][None])


def ref_lstm(x, w_ih, w_hh, b_ih, b_hh, w_out, b_out):
    """Pure-JAX reference matching torch.nn.LSTM + nn.Linear."""
    T, B, F = x.shape
    H = w_hh.shape[1]

    def step(carry, x_t):
        h, c = carry
        gates = x_t @ w_ih.T + b_ih + h @ w_hh.T + b_hh
        i, f, g, o = jnp.split(gates, 4, axis=-1)
        i = jax.nn.sigmoid(i)
        f = jax.nn.sigmoid(f)
        g = jnp.tanh(g)
        o = jax.nn.sigmoid(o)
        c = f * c + i * g
        h = o * jnp.tanh(c)
        return (h, c), h

    h0 = jnp.zeros((B, H), jnp.float32)
    c0 = jnp.zeros((B, H), jnp.float32)
    (h_n, c_n), hs = jax.lax.scan(step, (h0, c0), x)
    y = hs @ w_out.T + b_out
    return y, (h_n[None], c_n[None])


if __name__ == "__main__":
    # Small shapes consistent with the module's forward contract.
    seq_len, batch, n_features, hidden_size = 8, 2, 4, 32

    key = jax.random.PRNGKey(0)
    k = jax.random.split(key, 8)
    bound = 1.0 / np.sqrt(hidden_size)   # PyTorch-style uniform init range

    x = jax.random.normal(k[0], (seq_len, batch, n_features), jnp.float32)
    w_ih = jax.random.uniform(k[1], (4 * hidden_size, n_features), jnp.float32, -bound, bound)
    w_hh = jax.random.uniform(k[2], (4 * hidden_size, hidden_size), jnp.float32, -bound, bound)
    b_ih = jax.random.uniform(k[3], (4 * hidden_size,), jnp.float32, -bound, bound)
    b_hh = jax.random.uniform(k[4], (4 * hidden_size,), jnp.float32, -bound, bound)
    w_out = jax.random.uniform(k[5], (n_features, hidden_size), jnp.float32, -bound, bound)
    b_out = jax.random.uniform(k[6], (n_features,), jnp.float32, -bound, bound)

    # --- Test 1: single time-chunk (T fits in one chunk).
    y, (h_n, c_n) = lstm_forward(x, w_ih, w_hh, b_ih, b_hh, w_out, b_out)
    jax.block_until_ready((y, h_n, c_n))

    y_ref, (h_ref, c_ref) = ref_lstm(x, w_ih, w_hh, b_ih, b_hh, w_out, b_out)
    np.testing.assert_allclose(np.asarray(y), np.asarray(y_ref), rtol=1e-5, atol=1e-5)
    np.testing.assert_allclose(np.asarray(h_n), np.asarray(h_ref), rtol=1e-5, atol=1e-5)
    np.testing.assert_allclose(np.asarray(c_n), np.asarray(c_ref), rtol=1e-5, atol=1e-5)

    # --- Test 2: multi-chunk grid with a masked time tail (T not divisible by T_chunk),
    # exercising the persistent h/c carry across chunks.
    T2 = 13
    x2in = jax.random.normal(k[7], (T2, batch, n_features), jnp.float32)
    y2, (h2, c2) = lstm_forward(x2in, w_ih, w_hh, b_ih, b_hh, w_out, b_out, t_chunk=4)
    jax.block_until_ready((y2, h2, c2))

    y2_ref, (h2_ref, c2_ref) = ref_lstm(x2in, w_ih, w_hh, b_ih, b_hh, w_out, b_out)
    np.testing.assert_allclose(np.asarray(y2), np.asarray(y2_ref), rtol=1e-5, atol=1e-5)
    np.testing.assert_allclose(np.asarray(h2), np.asarray(h2_ref), rtol=1e-5, atol=1e-5)
    np.testing.assert_allclose(np.asarray(c2), np.asarray(c2_ref), rtol=1e-5, atol=1e-5)

    print("KERNEL_OK")
</pallas_src>

<mosaic_0001>
module attributes {stable_mosaic.version = 11 : i64} {
  func.func @_lstm_kernel(%arg0: i32, %arg1: memref<64x4xf32, #tpu.memory_space<vmem>>, %arg2: memref<4x128xf32, #tpu.memory_space<vmem>>, %arg3: memref<32x128xf32, #tpu.memory_space<vmem>>, %arg4: memref<1x128xf32, #tpu.memory_space<vmem>>, %arg5: memref<32x128xf32, #tpu.memory_space<vmem>>, %arg6: memref<1x128xf32, #tpu.memory_space<vmem>>, %arg7: memref<64x128xf32, #tpu.memory_space<vmem>>, %arg8: memref<8x32xf32, #tpu.memory_space<vmem>>, %arg9: memref<8x32xf32, #tpu.memory_space<vmem>>, %arg10: memref<64x128xf32, #tpu.memory_space<vmem>>, %arg11: memref<64x32xf32, #tpu.memory_space<vmem>>, %arg12: memref<8x32xf32, #tpu.memory_space<vmem>>, %arg13: memref<8x32xf32, #tpu.memory_space<vmem>>) attributes {dimension_semantics = [#tpu.dimension_semantics<arbitrary>], iteration_bounds = array<i64: 1>, scalar_prefetch = 0 : i64, scratch_operands = 4 : i64, tpu.core_type = #tpu.core_type<tc>, window_params = [{transform_indices = @transform_0, window_bounds = array<i64: 64, 4>}, {pipeline_mode = #tpu.pipeline_mode<synchronous>, transform_indices = @transform_1, window_bounds = array<i64: 4, 128>}, {pipeline_mode = #tpu.pipeline_mode<synchronous>, transform_indices = @transform_2, window_bounds = array<i64: 32, 128>}, {pipeline_mode = #tpu.pipeline_mode<synchronous>, transform_indices = @transform_3, window_bounds = array<i64: 1, 128>}, {pipeline_mode = #tpu.pipeline_mode<synchronous>, transform_indices = @transform_4, window_bounds = array<i64: 32, 128>}, {pipeline_mode = #tpu.pipeline_mode<synchronous>, transform_indices = @transform_5, window_bounds = array<i64: 1, 128>}, {transform_indices = @transform_6, window_bounds = array<i64: 64, 128>}, {pipeline_mode = #tpu.pipeline_mode<synchronous>, transform_indices = @transform_7, window_bounds = array<i64: 8, 32>}, {pipeline_mode = #tpu.pipeline_mode<synchronous>, transform_indices = @transform_8, window_bounds = array<i64: 8, 32>}]} {
    %c0_i32 = arith.constant 0 : i32
    %0 = arith.cmpi eq, %arg0, %c0_i32 : i32
    %1 = arith.extui %0 : i1 to i32
    %c0_i32_0 = arith.constant 0 : i32
    %2 = arith.cmpi ne, %1, %c0_i32_0 : i32
    scf.if %2 {
      %cst_84 = arith.constant 0.000000e+00 : f32
      %224 = vector.broadcast %cst_84 : f32 to vector<8x32xf32>
      %c0_85 = arith.constant 0 : index
      %c0_86 = arith.constant 0 : index
      %225 = vector.load %arg12[%c0_85, %c0_86] : memref<8x32xf32, #tpu.memory_space<vmem>>, vector<8x32xf32>
      tpu.vector_store %arg12[%c0_85, %c0_86], %224 {strides = array<i32>} : memref<8x32xf32, #tpu.memory_space<vmem>>, vector<8x32xf32>,
      %cst_87 = arith.constant 0.000000e+00 : f32
      %226 = vector.broadcast %cst_87 : f32 to vector<8x32xf32>
      %c0_88 = arith.constant 0 : index
      %c0_89 = arith.constant 0 : index
      %227 = vector.load %arg13[%c0_88, %c0_89] : memref<8x32xf32, #tpu.memory_space<vmem>>, vector<8x32xf32>
      tpu.vector_store %arg13[%c0_88, %c0_89], %226 {strides = array<i32>} : memref<8x32xf32, #tpu.memory_space<vmem>>, vector<8x32xf32>,
    } else {
    }
    %c0 = arith.constant 0 : index
    %c0_1 = arith.constant 0 : index
    %3 = vector.load %arg1[%c0, %c0_1] : memref<64x4xf32, #tpu.memory_space<vmem>>, vector<64x4xf32>
    %c0_2 = arith.constant 0 : index
    %c0_3 = arith.constant 0 : index
    %4 = vector.load %arg2[%c0_2, %c0_3] : memref<4x128xf32, #tpu.memory_space<vmem>>, vector<4x128xf32>
    %cst = arith.constant dense<0.000000e+00> : vector<64x128xf32>
    %5 = tpu.matmul %3, %4, %cst {dimension_numbers = #tpu.dot_dimension_numbers<[1], [0], [0], [1], [0, 0, 1, 1], [], []>} : vector<64x4xf32>, vector<4x128xf32>, vector<64x128xf32> -> vector<64x128xf32>
    %c0_4 = arith.constant 0 : index
    %c0_5 = arith.constant 0 : index
    %6 = vector.load %arg4[%c0_4, %c0_5] : memref<1x128xf32, #tpu.memory_space<vmem>>, vector<1x128xf32>
    %7 = vector.broadcast %6 : vector<1x128xf32> to vector<64x128xf32>
    %8 = arith.addf %5, %7 : vector<64x128xf32>
    %c0_6 = arith.constant 0 : index
    %c0_7 = arith.constant 0 : index
    %9 = vector.load %arg10[%c0_6, %c0_7] : memref<64x128xf32, #tpu.memory_space<vmem>>, vector<64x128xf32>
    tpu.vector_store %arg10[%c0_6, %c0_7], %8 {strides = array<i32>} : memref<64x128xf32, #tpu.memory_space<vmem>>, vector<64x128xf32>,
    %c0_8 = arith.constant 0 : index
    %c0_9 = arith.constant 0 : index
    %10 = vector.load %arg12[%c0_8, %c0_9] : memref<8x32xf32, #tpu.memory_space<vmem>>, vector<8x32xf32>
    %c0_10 = arith.constant 0 : index
    %c0_11 = arith.constant 0 : index
    %11 = vector.load %arg13[%c0_10, %c0_11] : memref<8x32xf32, #tpu.memory_space<vmem>>, vector<8x32xf32>
    %c0_i32_12 = arith.constant 0 : i32
    %c8_i32 = arith.constant 8 : i32
    %12 = arith.muli %c0_i32_12, %c8_i32 : i32
    %13 = tpu.assume_multiple %12, 8 : i32
    %14 = arith.index_cast %13 : i32 to index
    %c0_13 = arith.constant 0 : index
    %15 = vector.load %arg10[%14, %c0_13] : memref<64x128xf32, #tpu.memory_space<vmem>>, vector<8x128xf32>
    %c0_14 = arith.constant 0 : index
    %c0_15 = arith.constant 0 : index
    %16 = vector.load %arg3[%c0_14, %c0_15] : memref<32x128xf32, #tpu.memory_space<vmem>>, vector<32x128xf32>
    %cst_16 = arith.constant dense<0.000000e+00> : vector<8x128xf32>
    %17 = tpu.matmul %10, %16, %cst_16 {dimension_numbers = #tpu.dot_dimension_numbers<[1], [0], [0], [1], [0, 0, 1, 1], [], []>} : vector<8x32xf32>, vector<32x128xf32>, vector<8x128xf32> -> vector<8x128xf32>
    %18 = arith.addf %15, %17 : vector<8x128xf32>
    %19 = vector.extract_strided_slice %18 {offsets = [0, 0], sizes = [8, 96], strides = [1, 1]} : vector<8x128xf32> to vector<8x96xf32>
    %20 = arith.negf %19 : vector<8x96xf32>
    %21 = math.exp %20 : vector<8x96xf32>
    %cst_17 = arith.constant 1.000000e+00 : f32
    %22 = vector.broadcast %cst_17 : f32 to vector<8x96xf32>
    %23 = arith.addf %22, %21 : vector<8x96xf32>
    %24 = arith.divf %22, %23 : vector<8x96xf32>
    %25 = vector.extract_strided_slice %18 {offsets = [0, 96], sizes = [8, 32], strides = [1, 1]} : vector<8x128xf32> to vector<8x32xf32>
    %26 = math.tanh %25 : vector<8x32xf32>
    %27 = vector.extract_strided_slice %24 {offsets = [0, 0], sizes = [8, 32], strides = [1, 1]} : vector<8x96xf32> to vector<8x32xf32>
    %28 = vector.extract_strided_slice %24 {offsets = [0, 32], sizes = [8, 32], strides = [1, 1]} : vector<8x96xf32> to vector<8x32xf32>
    %29 = vector.extract_strided_slice %24 {offsets = [0, 64], sizes = [8, 32], strides = [1, 1]} : vector<8x96xf32> to vector<8x32xf32>
    %30 = arith.mulf %28, %11 : vector<8x32xf32>
    %31 = arith.mulf %27, %26 : vector<8x32xf32>
    %32 = arith.addf %30, %31 : vector<8x32xf32>
    %33 = math.tanh %32 : vector<8x32xf32>
    %34 = arith.mulf %29, %33 : vector<8x32xf32>
    %35 = arith.index_cast %13 : i32 to index
    %c0_18 = arith.constant 0 : index
    %36 = vector.load %arg11[%35, %c0_18] : memref<64x32xf32, #tpu.memory_space<vmem>>, vector<8x32xf32>
    tpu.vector_store %arg11[%35, %c0_18], %34 {strides = array<i32>} : memref<64x32xf32, #tpu.memory_space<vmem>>, vector<8x32xf32>,
    %c1_i32 = arith.constant 1 : i32
    %c8_i32_19 = arith.constant 8 : i32
    %37 = arith.muli %c1_i32, %c8_i32_19 : i32
    %38 = tpu.assume_multiple %37, 8 : i32
    %39 = arith.index_cast %38 : i32 to index
    %c0_20 = arith.constant 0 : index
    %40 = vector.load %arg10[%39, %c0_20] : memref<64x128xf32, #tpu.memory_space<vmem>>, vector<8x128xf32>
    %c0_21 = arith.constant 0 : index
    %c0_22 = arith.constant 0 : index
    %41 = vector.load %arg3[%c0_21, %c0_22] : memref<32x128xf32, #tpu.memory_space<vmem>>, vector<32x128xf32>
    %cst_23 = arith.constant dense<0.000000e+00> : vector<8x128xf32>
    %42 = tpu.matmul %34, %41, %cst_23 {dimension_numbers = #tpu.dot_dimension_numbers<[1], [0], [0], [1], [0, 0, 1, 1], [], []>} : vector<8x32xf32>, vector<32x128xf32>, vector<8x128xf32> -> vector<8x128xf32>
    %43 = arith.addf %40, %42 : vector<8x128xf32>
    %44 = vector.extract_strided_slice %43 {offsets = [0, 0], sizes = [8, 96], strides = [1, 1]} : vector<8x128xf32> to vector<8x96xf32>
    %45 = arith.negf %44 : vector<8x96xf32>
    %46 = math.exp %45 : vector<8x96xf32>
    %cst_24 = arith.constant 1.000000e+00 : f32
    %47 = vector.broadcast %cst_24 : f32 to vector<8x96xf32>
    %48 = arith.addf %47, %46 : vector<8x96xf32>
    %49 = arith.divf %47, %48 : vector<8x96xf32>
    %50 = vector.extract_strided_slice %43 {offsets = [0, 96], sizes = [8, 32], strides = [1, 1]} : vector<8x128xf32> to vector<8x32xf32>
    %51 = math.tanh %50 : vector<8x32xf32>
    %52 = vector.extract_strided_slice %49 {offsets = [0, 0], sizes = [8, 32], strides = [1, 1]} : vector<8x96xf32> to vector<8x32xf32>
    %53 = vector.extract_strided_slice %49 {offsets = [0, 32], sizes = [8, 32], strides = [1, 1]} : vector<8x96xf32> to vector<8x32xf32>
    %54 = vector.extract_strided_slice %49 {offsets = [0, 64], sizes = [8, 32], strides = [1, 1]} : vector<8x96xf32> to vector<8x32xf32>
    %55 = arith.mulf %53, %32 : vector<8x32xf32>
    %56 = arith.mulf %52, %51 : vector<8x32xf32>
    %57 = arith.addf %55, %56 : vector<8x32xf32>
    %58 = math.tanh %57 : vector<8x32xf32>
    %59 = arith.mulf %54, %58 : vector<8x32xf32>
    %60 = arith.index_cast %38 : i32 to index
    %c0_25 = arith.constant 0 : index
    %61 = vector.load %arg11[%60, %c0_25] : memref<64x32xf32, #tpu.memory_space<vmem>>, vector<8x32xf32>
    tpu.vector_store %arg11[%60, %c0_25], %59 {strides = array<i32>} : memref<64x32xf32, #tpu.memory_space<vmem>>, vector<8x32xf32>,
    %c2_i32 = arith.constant 2 : i32
    %c8_i32_26 = arith.constant 8 : i32
    %62 = arith.muli %c2_i32, %c8_i32_26 : i32
    %63 = tpu.assume_multiple %62, 8 : i32
    %64 = arith.index_cast %63 : i32 to index
    %c0_27 = arith.constant 0 : index
    %65 = vector.load %arg10[%64, %c0_27] : memref<64x128xf32, #tpu.memory_space<vmem>>, vector<8x128xf32>
    %c0_28 = arith.constant 0 : index
    %c0_29 = arith.constant 0 : index
    %66 = vector.load %arg3[%c0_28, %c0_29] : memref<32x128xf32, #tpu.memory_space<vmem>>, vector<32x128xf32>
    %cst_30 = arith.constant dense<0.000000e+00> : vector<8x128xf32>
    %67 = tpu.matmul %59, %66, %cst_30 {dimension_numbers = #tpu.dot_dimension_numbers<[1], [0], [0], [1], [0, 0, 1, 1], [], []>} : vector<8x32xf32>, vector<32x128xf32>, vector<8x128xf32> -> vector<8x128xf32>
    %68 = arith.addf %65, %67 : vector<8x128xf32>
    %69 = vector.extract_strided_slice %68 {offsets = [0, 0], sizes = [8, 96], strides = [1, 1]} : vector<8x128xf32> to vector<8x96xf32>
    %70 = arith.negf %69 : vector<8x96xf32>
    %71 = math.exp %70 : vector<8x96xf32>
    %cst_31 = arith.constant 1.000000e+00 : f32
    %72 = vector.broadcast %cst_31 : f32 to vector<8x96xf32>
    %73 = arith.addf %72, %71 : vector<8x96xf32>
    %74 = arith.divf %72, %73 : vector<8x96xf32>
    %75 = vector.extract_strided_slice %68 {offsets = [0, 96], sizes = [8, 32], strides = [1, 1]} : vector<8x128xf32> to vector<8x32xf32>
    %76 = math.tanh %75 : vector<8x32xf32>
    %77 = vector.extract_strided_slice %74 {offsets = [0, 0], sizes = [8, 32], strides = [1, 1]} : vector<8x96xf32> to vector<8x32xf32>
    %78 = vector.extract_strided_slice %74 {offsets = [0, 32], sizes = [8, 32], strides = [1, 1]} : vector<8x96xf32> to vector<8x32xf32>
    %79 = vector.extract_strided_slice %74 {offsets = [0, 64], sizes = [8, 32], strides = [1, 1]} : vector<8x96xf32> to vector<8x32xf32>
    %80 = arith.mulf %78, %57 : vector<8x32xf32>
    %81 = arith.mulf %77, %76 : vector<8x32xf32>
    %82 = arith.addf %80, %81 : vector<8x32xf32>
    %83 = math.tanh %82 : vector<8x32xf32>
    %84 = arith.mulf %79, %83 : vector<8x32xf32>
    %85 = arith.index_cast %63 : i32 to index
    %c0_32 = arith.constant 0 : index
    %86 = vector.load %arg11[%85, %c0_32] : memref<64x32xf32, #tpu.memory_space<vmem>>, vector<8x32xf32>
    tpu.vector_store %arg11[%85, %c0_32], %84 {strides = array<i32>} : memref<64x32xf32, #tpu.memory_space<vmem>>, vector<8x32xf32>,
    %c3_i32 = arith.constant 3 : i32
    %c8_i32_33 = arith.constant 8 : i32
    %87 = arith.muli %c3_i32, %c8_i32_33 : i32
    %88 = tpu.assume_multiple %87, 8 : i32
    %89 = arith.index_cast %88 : i32 to index
    %c0_34 = arith.constant 0 : index
    %90 = vector.load %arg10[%89, %c0_34] : memref<64x128xf32, #tpu.memory_space<vmem>>, vector<8x128xf32>
    %c0_35 = arith.constant 0 : index
    %c0_36 = arith.constant 0 : index
    %91 = vector.load %arg3[%c0_35, %c0_36] : memref<32x128xf32, #tpu.memory_space<vmem>>, vector<32x128xf32>
    %cst_37 = arith.constant dense<0.000000e+00> : vector<8x128xf32>
    %92 = tpu.matmul %84, %91, %cst_37 {dimension_numbers = #tpu.dot_dimension_numbers<[1], [0], [0], [1], [0, 0, 1, 1], [], []>} : vector<8x32xf32>, vector<32x128xf32>, vector<8x128xf32> -> vector<8x128xf32>
    %93 = arith.addf %90, %92 : vector<8x128xf32>
    %94 = vector.extract_strided_slice %93 {offsets = [0, 0], sizes = [8, 96], strides = [1, 1]} : vector<8x128xf32> to vector<8x96xf32>
    %95 = arith.negf %94 : vector<8x96xf32>
    %96 = math.exp %95 : vector<8x96xf32>
    %cst_38 = arith.constant 1.000000e+00 : f32
    %97 = vector.broadcast %cst_38 : f32 to vector<8x96xf32>
    %98 = arith.addf %97, %96 : vector<8x96xf32>
    %99 = arith.divf %97, %98 : vector<8x96xf32>
    %100 = vector.extract_strided_slice %93 {offsets = [0, 96], sizes = [8, 32], strides = [1, 1]} : vector<8x128xf32> to vector<8x32xf32>
    %101 = math.tanh %100 : vector<8x32xf32>
    %102 = vector.extract_strided_slice %99 {offsets = [0, 0], sizes = [8, 32], strides = [1, 1]} : vector<8x96xf32> to vector<8x32xf32>
    %103 = vector.extract_strided_slice %99 {offsets = [0, 32], sizes = [8, 32], strides = [1, 1]} : vector<8x96xf32> to vector<8x32xf32>
    %104 = vector.extract_strided_slice %99 {offsets = [0, 64], sizes = [8, 32], strides = [1, 1]} : vector<8x96xf32> to vector<8x32xf32>
    %105 = arith.mulf %103, %82 : vector<8x32xf32>
    %106 = arith.mulf %102, %101 : vector<8x32xf32>
    %107 = arith.addf %105, %106 : vector<8x32xf32>
    %108 = math.tanh %107 : vector<8x32xf32>
    %109 = arith.mulf %104, %108 : vector<8x32xf32>
    %110 = arith.index_cast %88 : i32 to index
    %c0_39 = arith.constant 0 : index
    %111 = vector.load %arg11[%110, %c0_39] : memref<64x32xf32, #tpu.memory_space<vmem>>, vector<8x32xf32>
    tpu.vector_store %arg11[%110, %c0_39], %109 {strides = array<i32>} : memref<64x32xf32, #tpu.memory_space<vmem>>, vector<8x32xf32>,
    %c4_i32 = arith.constant 4 : i32
    %c8_i32_40 = arith.constant 8 : i32
    %112 = arith.muli %c4_i32, %c8_i32_40 : i32
    %113 = tpu.assume_multiple %112, 8 : i32
    %114 = arith.index_cast %113 : i32 to index
    %c0_41 = arith.constant 0 : index
    %115 = vector.load %arg10[%114, %c0_41] : memref<64x128xf32, #tpu.memory_space<vmem>>, vector<8x128xf32>
    %c0_42 = arith.constant 0 : index
    %c0_43 = arith.constant 0 : index
    %116 = vector.load %arg3[%c0_42, %c0_43] : memref<32x128xf32, #tpu.memory_space<vmem>>, vector<32x128xf32>
    %cst_44 = arith.constant dense<0.000000e+00> : vector<8x128xf32>
    %117 = tpu.matmul %109, %116, %cst_44 {dimension_numbers = #tpu.dot_dimension_numbers<[1], [0], [0], [1], [0, 0, 1, 1], [], []>} : vector<8x32xf32>, vector<32x128xf32>, vector<8x128xf32> -> vector<8x128xf32>
    %118 = arith.addf %115, %117 : vector<8x128xf32>
    %119 = vector.extract_strided_slice %118 {offsets = [0, 0], sizes = [8, 96], strides = [1, 1]} : vector<8x128xf32> to vector<8x96xf32>
    %120 = arith.negf %119 : vector<8x96xf32>
    %121 = math.exp %120 : vector<8x96xf32>
    %cst_45 = arith.constant 1.000000e+00 : f32
    %122 = vector.broadcast %cst_45 : f32 to vector<8x96xf32>
    %123 = arith.addf %122, %121 : vector<8x96xf32>
    %124 = arith.divf %122, %123 : vector<8x96xf32>
    %125 = vector.extract_strided_slice %118 {offsets = [0, 96], sizes = [8, 32], strides = [1, 1]} : vector<8x128xf32> to vector<8x32xf32>
    %126 = math.tanh %125 : vector<8x32xf32>
    %127 = vector.extract_strided_slice %124 {offsets = [0, 0], sizes = [8, 32], strides = [1, 1]} : vector<8x96xf32> to vector<8x32xf32>
    %128 = vector.extract_strided_slice %124 {offsets = [0, 32], sizes = [8, 32], strides = [1, 1]} : vector<8x96xf32> to vector<8x32xf32>
    %129 = vector.extract_strided_slice %124 {offsets = [0, 64], sizes = [8, 32], strides = [1, 1]} : vector<8x96xf32> to vector<8x32xf32>
    %130 = arith.mulf %128, %107 : vector<8x32xf32>
    %131 = arith.mulf %127, %126 : vector<8x32xf32>
    %132 = arith.addf %130, %131 : vector<8x32xf32>
    %133 = math.tanh %132 : vector<8x32xf32>
    %134 = arith.mulf %129, %133 : vector<8x32xf32>
    %135 = arith.index_cast %113 : i32 to index
    %c0_46 = arith.constant 0 : index
    %136 = vector.load %arg11[%135, %c0_46] : memref<64x32xf32, #tpu.memory_space<vmem>>, vector<8x32xf32>
    tpu.vector_store %arg11[%135, %c0_46], %134 {strides = array<i32>} : memref<64x32xf32, #tpu.memory_space<vmem>>, vector<8x32xf32>,
    %c5_i32 = arith.constant 5 : i32
    %c8_i32_47 = arith.constant 8 : i32
    %137 = arith.muli %c5_i32, %c8_i32_47 : i32
    %138 = tpu.assume_multiple %137, 8 : i32
    %139 = arith.index_cast %138 : i32 to index
    %c0_48 = arith.constant 0 : index
    %140 = vector.load %arg10[%139, %c0_48] : memref<64x128xf32, #tpu.memory_space<vmem>>, vector<8x128xf32>
    %c0_49 = arith.constant 0 : index
    %c0_50 = arith.constant 0 : index
    %141 = vector.load %arg3[%c0_49, %c0_50] : memref<32x128xf32, #tpu.memory_space<vmem>>, vector<32x128xf32>
    %cst_51 = arith.constant dense<0.000000e+00> : vector<8x128xf32>
    %142 = tpu.matmul %134, %141, %cst_51 {dimension_numbers = #tpu.dot_dimension_numbers<[1], [0], [0], [1], [0, 0, 1, 1], [], []>} : vector<8x32xf32>, vector<32x128xf32>, vector<8x128xf32> -> vector<8x128xf32>
    %143 = arith.addf %140, %142 : vector<8x128xf32>
    %144 = vector.extract_strided_slice %143 {offsets = [0, 0], sizes = [8, 96], strides = [1, 1]} : vector<8x128xf32> to vector<8x96xf32>
    %145 = arith.negf %144 : vector<8x96xf32>
    %146 = math.exp %145 : vector<8x96xf32>
    %cst_52 = arith.constant 1.000000e+00 : f32
    %147 = vector.broadcast %cst_52 : f32 to vector<8x96xf32>
    %148 = arith.addf %147, %146 : vector<8x96xf32>
    %149 = arith.divf %147, %148 : vector<8x96xf32>
    %150 = vector.extract_strided_slice %143 {offsets = [0, 96], sizes = [8, 32], strides = [1, 1]} : vector<8x128xf32> to vector<8x32xf32>
    %151 = math.tanh %150 : vector<8x32xf32>
    %152 = vector.extract_strided_slice %149 {offsets = [0, 0], sizes = [8, 32], strides = [1, 1]} : vector<8x96xf32> to vector<8x32xf32>
    %153 = vector.extract_strided_slice %149 {offsets = [0, 32], sizes = [8, 32], strides = [1, 1]} : vector<8x96xf32> to vector<8x32xf32>
    %154 = vector.extract_strided_slice %149 {offsets = [0, 64], sizes = [8, 32], strides = [1, 1]} : vector<8x96xf32> to vector<8x32xf32>
    %155 = arith.mulf %153, %132 : vector<8x32xf32>
    %156 = arith.mulf %152, %151 : vector<8x32xf32>
    %157 = arith.addf %155, %156 : vector<8x32xf32>
    %158 = math.tanh %157 : vector<8x32xf32>
    %159 = arith.mulf %154, %158 : vector<8x32xf32>
    %160 = arith.index_cast %138 : i32 to index
    %c0_53 = arith.constant 0 : index
    %161 = vector.load %arg11[%160, %c0_53] : memref<64x32xf32, #tpu.memory_space<vmem>>, vector<8x32xf32>
    tpu.vector_store %arg11[%160, %c0_53], %159 {strides = array<i32>} : memref<64x32xf32, #tpu.memory_space<vmem>>, vector<8x32xf32>,
    %c6_i32 = arith.constant 6 : i32
    %c8_i32_54 = arith.constant 8 : i32
    %162 = arith.muli %c6_i32, %c8_i32_54 : i32
    %163 = tpu.assume_multiple %162, 8 : i32
    %164 = arith.index_cast %163 : i32 to index
    %c0_55 = arith.constant 0 : index
    %165 = vector.load %arg10[%164, %c0_55] : memref<64x128xf32, #tpu.memory_space<vmem>>, vector<8x128xf32>
    %c0_56 = arith.constant 0 : index
    %c0_57 = arith.constant 0 : index
    %166 = vector.load %arg3[%c0_56, %c0_57] : memref<32x128xf32, #tpu.memory_space<vmem>>, vector<32x128xf32>
    %cst_58 = arith.constant dense<0.000000e+00> : vector<8x128xf32>
    %167 = tpu.matmul %159, %166, %cst_58 {dimension_numbers = #tpu.dot_dimension_numbers<[1], [0], [0], [1], [0, 0, 1, 1], [], []>} : vector<8x32xf32>, vector<32x128xf32>, vector<8x128xf32> -> vector<8x128xf32>
    %168 = arith.addf %165, %167 : vector<8x128xf32>
    %169 = vector.extract_strided_slice %168 {offsets = [0, 0], sizes = [8, 96], strides = [1, 1]} : vector<8x128xf32> to vector<8x96xf32>
    %170 = arith.negf %169 : vector<8x96xf32>
    %171 = math.exp %170 : vector<8x96xf32>
    %cst_59 = arith.constant 1.000000e+00 : f32
    %172 = vector.broadcast %cst_59 : f32 to vector<8x96xf32>
    %173 = arith.addf %172, %171 : vector<8x96xf32>
    %174 = arith.divf %172, %173 : vector<8x96xf32>
    %175 = vector.extract_strided_slice %168 {offsets = [0, 96], sizes = [8, 32], strides = [1, 1]} : vector<8x128xf32> to vector<8x32xf32>
    %176 = math.tanh %175 : vector<8x32xf32>
    %177 = vector.extract_strided_slice %174 {offsets = [0, 0], sizes = [8, 32], strides = [1, 1]} : vector<8x96xf32> to vector<8x32xf32>
    %178 = vector.extract_strided_slice %174 {offsets = [0, 32], sizes = [8, 32], strides = [1, 1]} : vector<8x96xf32> to vector<8x32xf32>
    %179 = vector.extract_strided_slice %174 {offsets = [0, 64], sizes = [8, 32], strides = [1, 1]} : vector<8x96xf32> to vector<8x32xf32>
    %180 = arith.mulf %178, %157 : vector<8x32xf32>
    %181 = arith.mulf %177, %176 : vector<8x32xf32>
    %182 = arith.addf %180, %181 : vector<8x32xf32>
    %183 = math.tanh %182 : vector<8x32xf32>
    %184 = arith.mulf %179, %183 : vector<8x32xf32>
    %185 = arith.index_cast %163 : i32 to index
    %c0_60 = arith.constant 0 : index
    %186 = vector.load %arg11[%185, %c0_60] : memref<64x32xf32, #tpu.memory_space<vmem>>, vector<8x32xf32>
    tpu.vector_store %arg11[%185, %c0_60], %184 {strides = array<i32>} : memref<64x32xf32, #tpu.memory_space<vmem>>, vector<8x32xf32>,
    %c7_i32 = arith.constant 7 : i32
    %c8_i32_61 = arith.constant 8 : i32
    %187 = arith.muli %c7_i32, %c8_i32_61 : i32
    %188 = tpu.assume_multiple %187, 8 : i32
    %189 = arith.index_cast %188 : i32 to index
    %c0_62 = arith.constant 0 : index
    %190 = vector.load %arg10[%189, %c0_62] : memref<64x128xf32, #tpu.memory_space<vmem>>, vector<8x128xf32>
    %c0_63 = arith.constant 0 : index
    %c0_64 = arith.constant 0 : index
    %191 = vector.load %arg3[%c0_63, %c0_64] : memref<32x128xf32, #tpu.memory_space<vmem>>, vector<32x128xf32>
    %cst_65 = arith.constant dense<0.000000e+00> : vector<8x128xf32>
    %192 = tpu.matmul %184, %191, %cst_65 {dimension_numbers = #tpu.dot_dimension_numbers<[1], [0], [0], [1], [0, 0, 1, 1], [], []>} : vector<8x32xf32>, vector<32x128xf32>, vector<8x128xf32> -> vector<8x128xf32>
    %193 = arith.addf %190, %192 : vector<8x128xf32>
    %194 = vector.extract_strided_slice %193 {offsets = [0, 0], sizes = [8, 96], strides = [1, 1]} : vector<8x128xf32> to vector<8x96xf32>
    %195 = arith.negf %194 : vector<8x96xf32>
    %196 = math.exp %195 : vector<8x96xf32>
    %cst_66 = arith.constant 1.000000e+00 : f32
    %197 = vector.broadcast %cst_66 : f32 to vector<8x96xf32>
    %198 = arith.addf %197, %196 : vector<8x96xf32>
    %199 = arith.divf %197, %198 : vector<8x96xf32>
    %200 = vector.extract_strided_slice %193 {offsets = [0, 96], sizes = [8, 32], strides = [1, 1]} : vector<8x128xf32> to vector<8x32xf32>
    %201 = math.tanh %200 : vector<8x32xf32>
    %202 = vector.extract_strided_slice %199 {offsets = [0, 0], sizes = [8, 32], strides = [1, 1]} : vector<8x96xf32> to vector<8x32xf32>
    %203 = vector.extract_strided_slice %199 {offsets = [0, 32], sizes = [8, 32], strides = [1, 1]} : vector<8x96xf32> to vector<8x32xf32>
    %204 = vector.extract_strided_slice %199 {offsets = [0, 64], sizes = [8, 32], strides = [1, 1]} : vector<8x96xf32> to vector<8x32xf32>
    %205 = arith.mulf %203, %182 : vector<8x32xf32>
    %206 = arith.mulf %202, %201 : vector<8x32xf32>
    %207 = arith.addf %205, %206 : vector<8x32xf32>
    %208 = math.tanh %207 : vector<8x32xf32>
    %209 = arith.mulf %204, %208 : vector<8x32xf32>
    %210 = arith.index_cast %188 : i32 to index
    %c0_67 = arith.constant 0 : index
    %211 = vector.load %arg11[%210, %c0_67] : memref<64x32xf32, #tpu.memory_space<vmem>>, vector<8x32xf32>
    tpu.vector_store %arg11[%210, %c0_67], %209 {strides = array<i32>} : memref<64x32xf32, #tpu.memory_space<vmem>>, vector<8x32xf32>,
    %c8_i32_68 = arith.constant 8 : i32
    %c0_69 = arith.constant 0 : index
    %c0_70 = arith.constant 0 : index
    %212 = vector.load %arg12[%c0_69, %c0_70] : memref<8x32xf32, #tpu.memory_space<vmem>>, vector<8x32xf32>
    tpu.vector_store %arg12[%c0_69, %c0_70], %209 {strides = array<i32>} : memref<8x32xf32, #tpu.memory_space<vmem>>, vector<8x32xf32>,
    %c0_71 = arith.constant 0 : index
    %c0_72 = arith.constant 0 : index
    %213 = vector.load %arg13[%c0_71, %c0_72] : memref<8x32xf32, #tpu.memory_space<vmem>>, vector<8x32xf32>
    tpu.vector_store %arg13[%c0_71, %c0_72], %207 {strides = array<i32>} : memref<8x32xf32, #tpu.memory_space<vmem>>, vector<8x32xf32>,
    %c0_i32_73 = arith.constant 0 : i32
    %214 = arith.cmpi eq, %arg0, %c0_i32_73 : i32
    %215 = arith.extui %214 : i1 to i32
    %c0_i32_74 = arith.constant 0 : i32
    %216 = arith.cmpi ne, %215, %c0_i32_74 : i32
    scf.if %216 {
      %c0_84 = arith.constant 0 : index
      %c0_85 = arith.constant 0 : index
      %224 = vector.load %arg8[%c0_84, %c0_85] : memref<8x32xf32, #tpu.memory_space<vmem>>, vector<8x32xf32>
      tpu.vector_store %arg8[%c0_84, %c0_85], %209 {strides = array<i32>} : memref<8x32xf32, #tpu.memory_space<vmem>>, vector<8x32xf32>,
      %c0_86 = arith.constant 0 : index
      %c0_87 = arith.constant 0 : index
      %225 = vector.load %arg9[%c0_86, %c0_87] : memref<8x32xf32, #tpu.memory_space<vmem>>, vector<8x32xf32>
      tpu.vector_store %arg9[%c0_86, %c0_87], %207 {strides = array<i32>} : memref<8x32xf32, #tpu.memory_space<vmem>>, vector<8x32xf32>,
    } else {
    }
    %c0_75 = arith.constant 0 : index
    %c0_76 = arith.constant 0 : index
    %217 = vector.load %arg11[%c0_75, %c0_76] : memref<64x32xf32, #tpu.memory_space<vmem>>, vector<64x32xf32>
    %c0_77 = arith.constant 0 : index
    %c0_78 = arith.constant 0 : index
    %218 = vector.load %arg5[%c0_77, %c0_78] : memref<32x128xf32, #tpu.memory_space<vmem>>, vector<32x128xf32>
    %cst_79 = arith.constant dense<0.000000e+00> : vector<64x128xf32>
    %219 = tpu.matmul %217, %218, %cst_79 {dimension_numbers = #tpu.dot_dimension_numbers<[1], [0], [0], [1], [0, 0, 1, 1], [], []>} : vector<64x32xf32>, vector<32x128xf32>, vector<64x128xf32> -> vector<64x128xf32>
    %c0_80 = arith.constant 0 : index
    %c0_81 = arith.constant 0 : index
    %220 = vector.load %arg6[%c0_80, %c0_81] : memref<1x128xf32, #tpu.memory_space<vmem>>, vector<1x128xf32>
    %221 = vector.broadcast %220 : vector<1x128xf32> to vector<64x128xf32>
    %222 = arith.addf %219, %221 : vector<64x128xf32>
    %c0_82 = arith.constant 0 : index
    %c0_83 = arith.constant 0 : index
    %223 = vector.load %arg7[%c0_82, %c0_83] : memref<64x128xf32, #tpu.memory_space<vmem>>, vector<64x128xf32>
    tpu.vector_store %arg7[%c0_82, %c0_83], %222 {strides = array<i32>} : memref<64x128xf32, #tpu.memory_space<vmem>>, vector<64x128xf32>,
    return
  }
  func.func @transform_0(%arg0: i32) -> (i32, i32) {
    %c0_i32 = arith.constant 0 : i32
    %c0_i32_0 = arith.constant 0 : i32
    return %arg0, %c0_i32 : i32, i32
  }
  func.func @transform_1(%arg0: i32) -> (i32, i32) {
    %c0_i32 = arith.constant 0 : i32
    %c0_i32_0 = arith.constant 0 : i32
    %c0_i32_1 = arith.constant 0 : i32
    return %c0_i32, %c0_i32_0 : i32, i32
  }
  func.func @transform_2(%arg0: i32) -> (i32, i32) {
    %c0_i32 = arith.constant 0 : i32
    %c0_i32_0 = arith.constant 0 : i32
    %c0_i32_1 = arith.constant 0 : i32
    return %c0_i32, %c0_i32_0 : i32, i32
  }
  func.func @transform_3(%arg0: i32) -> (i32, i32) {
    %c0_i32 = arith.constant 0 : i32
    %c0_i32_0 = arith.constant 0 : i32
    %c0_i32_1 = arith.constant 0 : i32
    return %c0_i32, %c0_i32_0 : i32, i32
  }
  func.func @transform_4(%arg0: i32) -> (i32, i32) {
    %c0_i32 = arith.constant 0 : i32
    %c0_i32_0 = arith.constant 0 : i32
    %c0_i32_1 = arith.constant 0 : i32
    return %c0_i32, %c0_i32_0 : i32, i32
  }
  func.func @transform_5(%arg0: i32) -> (i32, i32) {
    %c0_i32 = arith.constant 0 : i32
    %c0_i32_0 = arith.constant 0 : i32
    %c0_i32_1 = arith.constant 0 : i32
    return %c0_i32, %c0_i32_0 : i32, i32
  }
  func.func @transform_6(%arg0: i32) -> (i32, i32) {
    %c0_i32 = arith.constant 0 : i32
    %c0_i32_0 = arith.constant 0 : i32
    return %arg0, %c0_i32 : i32, i32
  }
  func.func @transform_7(%arg0: i32) -> (i32, i32) {
    %c0_i32 = arith.constant 0 : i32
    %c0_i32_0 = arith.constant 0 : i32
    %c0_i32_1 = arith.constant 0 : i32
    return %c0_i32, %c0_i32_0 : i32, i32
  }
  func.func @transform_8(%arg0: i32) -> (i32, i32) {
    %c0_i32 = arith.constant 0 : i32
    %c0_i32_0 = arith.constant 0 : i32
    %c0_i32_1 = arith.constant 0 : i32
    return %c0_i32, %c0_i32_0 : i32, i32
  }
}

</mosaic_0001>

<llo_original>
// kernel: tpu_custom_call.1
$region0: #{tpu_custom_call.1}
  #allocation0 [shape = 'u32[]', space=smem, size = 0x4, offset = 0x4, fixed_abs, tag = 'smem constant byte address 0x4 - core index']
  #allocation1 [shape = 'u32[144,128]{1,0:T(1,128)}', space=vmem, size = 0x12000, scoped, tag = 'internal scratch']
  #allocation2 [shape = 'f32[64,128]{1,0:T(8,128)}', space=vmem, size = 0x8000, scoped, tag = 'scratch operand']
  #allocation3 [shape = 'f32[64,32]{1,0:T(8,128)}', space=vmem, size = 0x8000, scoped, tag = 'scratch operand']
  #allocation4 [shape = 'f32[8,32]{1,0:T(8,128)}', space=vmem, size = 0x1000, scoped, tag = 'scratch operand']
  #allocation5 [shape = 'f32[8,32]{1,0:T(8,128)}', space=vmem, size = 0x1000, scoped, tag = 'scratch operand']
  %s0 = inlined_call_operand.vmem [shape: f32[64,4], index: 0, kind: input, shape index: {}]
  %s1 = inlined_call_operand.vmem [shape: f32[4,128], index: 1, kind: input, shape index: {}]
  %s2 = inlined_call_operand.vmem [shape: f32[32,128], index: 2, kind: input, shape index: {}]
  %s3 = inlined_call_operand.vmem [shape: f32[1,128], index: 3, kind: input, shape index: {}]
  %s4 = inlined_call_operand.vmem [shape: f32[32,128], index: 4, kind: input, shape index: {}]
  %s5 = inlined_call_operand.vmem [shape: f32[1,128], index: 5, kind: input, shape index: {}]
  %s6 = inlined_call_operand.hbm [shape: f32[64,128], index: 6, kind: output, shape index: {0}]
  %s7 = inlined_call_operand.hbm [shape: f32[8,32], index: 7, kind: output, shape index: {1}]
  %s8 = inlined_call_operand.hbm [shape: f32[8,32], index: 8, kind: output, shape index: {2}]
  %9 = xla_tuple %s6, %s7, %s8
  %s10 = sld [smem:[#allocation0]]
  $region58: #{tpu_custom_call.1} parent=0
    _
  %s12 = ssub.s32 1, %s10
  %s13 = scalar_select 0, %s12, %s10
  $region1: #{tpu_custom_call.1} parent=0
    #allocation6 [shape = 'u8[32768]{0}', space=vmem, size = 0x8000, scoped, tag = 'output window, operand 0, single buffered']
    #allocation7 [shape = 's32[1]{0}', space=sflag, size = 0x4, scoped, tag = 'scoped memory for tpu_custom_call.1']
    #allocation8 [shape = 'u8[4096]{0}', space=vmem, size = 0x1000, scoped, tag = 'output window, operand 1, single buffered']
    #allocation9 [shape = 's32[1]{0}', space=sflag, size = 0x4, scoped, tag = 'scoped memory for tpu_custom_call.1']
    #allocation10 [shape = 'u8[4096]{0}', space=vmem, size = 0x1000, scoped, tag = 'output window, operand 2, single buffered']
    %14 = vsyncpa [#allocation7], 0
    %15 = vsyncpa [#allocation9], 0
    // Predicated region
    $region2: #{tpu_custom_call.1} parent=1 // pred_check
      _
    $region3: #{tpu_custom_call.1} parent=1 // pred_check_branch
      %17 = sbr.rel (0) target = $region5
    $region4: #{tpu_custom_call.1} parent=1 // pred_region
      _
    $region5: #{tpu_custom_call.1} parent=1 // pred_fallthru
      _
    // Predicated region
    $region6: #{tpu_custom_call.1} parent=1 // pred_check
      _
    $region7: #{tpu_custom_call.1} parent=1 // pred_check_branch
      %19 = sbr.rel (0) target = $region9
    $region8: #{tpu_custom_call.1} parent=1 // pred_region
      _
    $region9: #{tpu_custom_call.1} parent=1 // pred_fallthru
      _
    // Predicated region
    $region10: #{tpu_custom_call.1} parent=1 // pred_check
      _
    $region11: #{tpu_custom_call.1} parent=1 // pred_check_branch
      %21 = sbr.rel (0) target = $region13
    $region12: #{tpu_custom_call.1} parent=1 // pred_region
      _
    $region13: #{tpu_custom_call.1} parent=1 // pred_fallthru
      _
    // Predicated region
    $region14: #{tpu_custom_call.1} parent=1 // pred_check
      _
    $region15: #{tpu_custom_call.1} parent=1 // pred_check_branch
      %23 = sbr.rel (0) target = $region17
    $region16: #{tpu_custom_call.1} parent=1 // pred_region
      _
    $region17: #{tpu_custom_call.1} parent=1 // pred_fallthru
      _
    // Predicated region
    $region18: #{tpu_custom_call.1} parent=1 // pred_check
      _
    $region19: #{tpu_custom_call.1} parent=1 // pred_check_branch
      %25 = sbr.rel (0) target = $region21
    $region20: #{tpu_custom_call.1} parent=1 // pred_region
      _
    $region21: #{tpu_custom_call.1} parent=1 // pred_fallthru
      _
    // Predicated region
    $region22: #{tpu_custom_call.1} parent=1 // pred_check
      _
    $region23: #{tpu_custom_call.1} parent=1 // pred_check_branch
      %27 = sbr.rel (0) target = $region25
    $region24: #{tpu_custom_call.1} parent=1 // pred_region
      _
    $region25: #{tpu_custom_call.1} parent=1 // pred_fallthru
      _
    %p28 = scmp.eq.s32.totalorder 0, 0
    // Predicated region
    $region26: #{tpu_custom_call.1} parent=1 // pred_check
      %p29 = pneg %p28
    $region27: #{tpu_custom_call.1} parent=1 // pred_check_branch
      %31 = sbr.rel (%p29) target = $region29
    $region28: #{tpu_custom_call.1} parent=1 // pred_region
      %vm32 = vcmask 261120
      %33 = vst.msk [vmem:[#allocation4] sm:$0xff] %vm32, 0.0
      %34 = vst.msk [vmem:[#allocation5] sm:$0xff] %vm32, 0.0
    $region29: #{tpu_custom_call.1} parent=1 // pred_fallthru
      _
    %v35 = vld [vmem:[%s0] sm:$0xff]
    %v36 = vld [vmem:[%s0 + $0x8] sm:$0xff]
    %v37 = vld [vmem:[%s0 + $0x10] sm:$0xff]
    %v38 = vld [vmem:[%s0 + $0x18] sm:$0xff]
    %v39 = vld [vmem:[%s0 + $0x20] sm:$0xff]
    %v40 = vld [vmem:[%s0 + $0x28] sm:$0xff]
    %v41 = vld [vmem:[%s0 + $0x30] sm:$0xff]
    %v42 = vld [vmem:[%s0 + $0x38] sm:$0xff]
    %v43 = vld [vmem:[%s1] sm:$0xf]
    %v44 = vld [vmem:[%s3] sm:$0x1]
    %v46 = vlaneseq
    %v47 = vshrl.u32 %v46, 7
    %v48 = vsub.s32 0, %v47
    %v49 = vrot.slane %v44, %v48
    %vm51 = vcmask 31744
    %v53 = vsel %vm51, %v35, 0
    %v56 = vsel %vm51, %v36, 0
    %v59 = vsel %vm51, %v37, 0
    %v62 = vsel %vm51, %v38, 0
    %v65 = vsel %vm51, %v39, 0
    %v68 = vsel %vm51, %v40, 0
    %v71 = vsel %vm51, %v41, 0
    %v74 = vsel %vm51, %v42, 0
    %vm76 = vcmask 1043456
    %v78 = vsel %vm76, %v43, 0
    %80 = vmatprep.subr.mxu0 0.0
    %81 = vmatpush1.msra.mxu0 %v78
    %82 = vmatprep.subr.mxu0 0.0
    %83 = vmatpush1.msra.mxu0 0.0
    %84 = vmatprep.subr.mxu0 0.0
    %85 = vmatpush1.msra.mxu0 0.0
    %86 = vmatprep.subr.mxu0 0.0
    %87 = vmatpush1.msra.mxu0 0.0
    %88 = vmatprep.subr.mxu0 0.0
    %89 = vmatpush1.msra.mxu0 0.0
    %90 = vmatprep.subr.mxu0 0.0
    %91 = vmatpush1.msra.mxu0 0.0
    %92 = vmatprep.subr.mxu0 0.0
    %93 = vmatpush1.msra.mxu0 0.0
    %94 = vmatprep.subr.mxu0 0.0
    %95 = vmatpush1.msra.mxu0 0.0
    %96 = vmatprep.subr.mxu0 0.0
    %97 = vmatpush1.msra.mxu0 0.0
    %98 = vmatprep.subr.mxu0 0.0
    %99 = vmatpush1.msra.mxu0 0.0
    %100 = vmatprep.subr.mxu0 0.0
    %101 = vmatpush1.msra.mxu0 0.0
    %102 = vmatprep.subr.mxu0 0.0
    %103 = vmatpush1.msra.mxu0 0.0
    %104 = vmatprep.subr.mxu0 0.0
    %105 = vmatpush1.msra.mxu0 0.0
    %106 = vmatprep.subr.mxu0 0.0
    %107 = vmatpush1.msra.mxu0 0.0
    %108 = vmatprep.subr.mxu0 0.0
    %109 = vmatpush1.msra.mxu0 0.0
    %110 = vmatprep.subr.mxu0 0.0
    %111 = vmatpush1.msra.mxu0 0.0
    %112 = vmatprep.subr.mxu0 0.0
    %113 = vmatpush1.msra.mxu0 0.0
    %114 = vmatprep.subr.mxu0 0.0
    %115 = vmatpush1.msra.mxu0 0.0
    %116 = vmatprep.subr.mxu0 0.0
    %117 = vmatpush1.msra.mxu0 0.0
    %118 = vmatprep.subr.mxu0 0.0
    %119 = vmatpush1.msra.mxu0 0.0
    %120 = vmatprep.subr.mxu0 0.0
    %121 = vmatpush1.msra.mxu0 0.0
    %122 = vmatprep.subr.mxu0 0.0
    %123 = vmatpush1.msra.mxu0 0.0
    %124 = vmatprep.subr.mxu0 0.0
    %125 = vmatpush1.msra.mxu0 0.0
    %126 = vmatprep.subr.mxu0 0.0
    %127 = vmatpush1.msra.mxu0 0.0
    %128 = vmatprep.subr.mxu0 0.0
    %129 = vmatpush1.msra.mxu0 0.0
    %130 = vmatprep.subr.mxu0 0.0
    %131 = vmatpush1.msra.mxu0 0.0
    %132 = vmatprep.subr.mxu0 0.0
    %133 = vmatpush1.msra.mxu0 0.0
    %134 = vmatprep.subr.mxu0 0.0
    %135 = vmatpush1.msra.mxu0 0.0
    %136 = vmatprep.subr.mxu0 0.0
    %137 = vmatpush1.msra.mxu0 0.0
    %138 = vmatprep.subr.mxu0 0.0
    %139 = vmatpush1.msra.mxu0 0.0
    %140 = vmatprep.subr.mxu0 0.0
    %141 = vmatpush1.msra.mxu0 0.0
    %142 = vmatprep.subr.mxu0 0.0
    %143 = vmatpush1.msra.mxu0 0.0
    %144 = vmatprep.mubr.f32.mxu0 0.0
    %145 = vmatmul.mubr.f32.gmra.mrb[0].mxu0 %v53
    %v146 = vpop.f32.mrb[0].mxu0
    %v147 = vadd.f32 %v49, %v146
    %v148 = vpop.f32.mrb[0].mxu0
    %149 = vmatprep.mubr.f32.mxu0 0.0
    %150 = vmatmul.mubr.f32.gmra.mrb[0].mxu0 %v56
    %v151 = vpop.f32.mrb[0].mxu0
    %v152 = vadd.f32 %v49, %v151
    %v153 = vpop.f32.mrb[0].mxu0
    %154 = vmatprep.mubr.f32.mxu0 0.0
    %155 = vmatmul.mubr.f32.gmra.mrb[0].mxu0 %v59
    %v156 = vpop.f32.mrb[0].mxu0
    %v157 = vadd.f32 %v49, %v156
    %v158 = vpop.f32.mrb[0].mxu0
    %159 = vmatprep.mubr.f32.mxu0 0.0
    %160 = vmatmul.mubr.f32.gmra.mrb[0].mxu0 %v62
    %v161 = vpop.f32.mrb[0].mxu0
    %v162 = vadd.f32 %v49, %v161
    %v163 = vpop.f32.mrb[0].mxu0
    %164 = vmatprep.mubr.f32.mxu0 0.0
    %165 = vmatmul.mubr.f32.gmra.mrb[0].mxu0 %v65
    %v166 = vpop.f32.mrb[0].mxu0
    %v167 = vadd.f32 %v49, %v166
    %v168 = vpop.f32.mrb[0].mxu0
    %169 = vmatprep.mubr.f32.mxu0 0.0
    %170 = vmatmul.mubr.f32.gmra.mrb[0].mxu0 %v68
    %v171 = vpop.f32.mrb[0].mxu0
    %v172 = vadd.f32 %v49, %v171
    %v173 = vpop.f32.mrb[0].mxu0
    %174 = vmatprep.mubr.f32.mxu0 0.0
    %175 = vmatmul.mubr.f32.gmra.mrb[0].mxu0 %v71
    %v176 = vpop.f32.mrb[0].mxu0
    %v177 = vadd.f32 %v49, %v176
    %v178 = vpop.f32.mrb[0].mxu0
    %179 = vmatprep.mubr.f32.mxu0 0.0
    %180 = vmatmul.mubr.f32.gmra.mrb[0].mxu0 %v74
    %v181 = vpop.f32.mrb[0].mxu0
    %v182 = vadd.f32 %v49, %v181
    %v183 = vpop.f32.mrb[0].mxu0
    %184 = vdwg.mxu0
    %185 = vst [vmem:[#allocation2] sm:$0xff] %v147
    %186 = vst [vmem:[#allocation2 + $0x8] sm:$0xff] %v152
    %187 = vst [vmem:[#allocation2 + $0x10] sm:$0xff] %v157
    %188 = vst [vmem:[#allocation2 + $0x18] sm:$0xff] %v162
    %189 = vst [vmem:[#allocation2 + $0x20] sm:$0xff] %v167
    %190 = vst [vmem:[#allocation2 + $0x28] sm:$0xff] %v172
    %191 = vst [vmem:[#allocation2 + $0x30] sm:$0xff] %v177
    %192 = vst [vmem:[#allocation2 + $0x38] sm:$0xff] %v182
    %v193 = vld [vmem:[#allocation4] sm:$0xff]
    %v194 = vld [vmem:[#allocation5] sm:$0xff]
    %v195 = vld [vmem:[#allocation2] sm:$0xff]
    %v196 = vld [vmem:[%s2] sm:$0xff]
    %v197 = vld [vmem:[%s2 + $0x8] sm:$0xff]
    %v198 = vld [vmem:[%s2 + $0x10] sm:$0xff]
    %v199 = vld [vmem:[%s2 + $0x18] sm:$0xff]
    %vm200 = vcmask 261120
    %v202 = vsel %vm200, %v193, 0
    %204 = vmatprep.subr.mxu0 0.0
    %205 = vmatpush1.msra.mxu0 %v196
    %206 = vmatprep.subr.mxu0 0.0
    %207 = vmatpush1.msra.mxu0 %v197
    %208 = vmatprep.subr.mxu0 0.0
    %209 = vmatpush1.msra.mxu0 %v198
    %210 = vmatprep.subr.mxu0 0.0
    %211 = vmatpush1.msra.mxu0 %v199
    %212 = vmatprep.subr.mxu0 0.0
    %213 = vmatpush1.msra.mxu0 0.0
    %214 = vmatprep.subr.mxu0 0.0
    %215 = vmatpush1.msra.mxu0 0.0
    %216 = vmatprep.subr.mxu0 0.0
    %217 = vmatpush1.msra.mxu0 0.0
    %218 = vmatprep.subr.mxu0 0.0
    %219 = vmatpush1.msra.mxu0 0.0
    %220 = vmatprep.subr.mxu0 0.0
    %221 = vmatpush1.msra.mxu0 0.0
    %222 = vmatprep.subr.mxu0 0.0
    %223 = vmatpush1.msra.mxu0 0.0
    %224 = vmatprep.subr.mxu0 0.0
    %225 = vmatpush1.msra.mxu0 0.0
    %226 = vmatprep.subr.mxu0 0.0
    %227 = vmatpush1.msra.mxu0 0.0
    %228 = vmatprep.subr.mxu0 0.0
    %229 = vmatpush1.msra.mxu0 0.0
    %230 = vmatprep.subr.mxu0 0.0
    %231 = vmatpush1.msra.mxu0 0.0
    %232 = vmatprep.subr.mxu0 0.0
    %233 = vmatpush1.msra.mxu0 0.0
    %234 = vmatprep.subr.mxu0 0.0
    %235 = vmatpush1.msra.mxu0 0.0
    %236 = vmatprep.subr.mxu0 0.0
    %237 = vmatpush1.msra.mxu0 0.0
    %238 = vmatprep.subr.mxu0 0.0
    %239 = vmatpush1.msra.mxu0 0.0
    %240 = vmatprep.subr.mxu0 0.0
    %241 = vmatpush1.msra.mxu0 0.0
    %242 = vmatprep.subr.mxu0 0.0
    %243 = vmatpush1.msra.mxu0 0.0
    %244 = vmatprep.subr.mxu0 0.0
    %245 = vmatpush1.msra.mxu0 0.0
    %246 = vmatprep.subr.mxu0 0.0
    %247 = vmatpush1.msra.mxu0 0.0
    %248 = vmatprep.subr.mxu0 0.0
    %249 = vmatpush1.msra.mxu0 0.0
    %250 = vmatprep.subr.mxu0 0.0
    %251 = vmatpush1.msra.mxu0 0.0
    %252 = vmatprep.subr.mxu0 0.0
    %253 = vmatpush1.msra.mxu0 0.0
    %254 = vmatprep.subr.mxu0 0.0
    %255 = vmatpush1.msra.mxu0 0.0
    %256 = vmatprep.subr.mxu0 0.0
    %257 = vmatpush1.msra.mxu0 0.0
    %258 = vmatprep.subr.mxu0 0.0
    %259 = vmatpush1.msra.mxu0 0.0
    %260 = vmatprep.subr.mxu0 0.0
    %261 = vmatpush1.msra.mxu0 0.0
    %262 = vmatprep.subr.mxu0 0.0
    %263 = vmatpush1.msra.mxu0 0.0
    %264 = vmatprep.subr.mxu0 0.0
    %265 = vmatpush1.msra.mxu0 0.0
    %266 = vmatprep.subr.mxu0 0.0
    %267 = vmatpush1.msra.mxu0 0.0
    %268 = vmatprep.mubr.f32.mxu0 0.0
    %269 = vmatmul.mubr.f32.gmra.mrb[0].mxu0 %v202
    %v270 = vpop.f32.mrb[0].mxu0
    %v271 = vadd.f32 0.0, %v270
    %v272 = vpop.f32.mrb[0].mxu0
    %273 = vdwg.mxu0
    %v274 = vadd.f32 %v195, %v271
    %v275 = vxor.u32 %v274, 2147483648
    %v276 = vmul.f32 %v275, 1.442695
    %v277 = vpow.pop %v276
    %v278 = vadd.f32 %v277, 1.0
    %v279 = vrcp.pop %v278
    %v280 = vmul.f32 1.0, %v279
    %v281 = vtanh.pop %v274
    %283 = vrot.lane.b32.xlu0 %v194, 32
    %v284 = vpop.permute.xlu0 %283
    %v286 = vmul.f32 %v280, %v284
    %288 = vrot.lane.b32.xlu0 %v281, 32
    %v289 = vpop.permute.xlu0 %288
    %v291 = vmul.f32 %v280, %v289
    %293 = vrot.lane.b32.xlu0 %v291, 32
    %v294 = vpop.permute.xlu0 %293
    %v296 = vadd.f32 %v286, %v294
    %v297 = vtanh.pop %v296
    %299 = vrot.lane.b32.xlu0 %v297, 32
    %v300 = vpop.permute.xlu0 %299
    %v302 = vmul.f32 %v280, %v300
    %304 = vrot.lane.b32.xlu0 %v302, 64
    %v305 = vpop.permute.xlu0 %304
    %307 = vst.msk [vmem:[#allocation3] sm:$0xff] %vm200, %v305
    %s308 = scalar_lea.vmem [#allocation2], 8
    %v309 = vld [vmem:[%s308] sm:$0xff]
    %v310 = vld [vmem:[%s2] sm:$0xff]
    %v311 = vld [vmem:[%s2 + $0x8] sm:$0xff]
    %v312 = vld [vmem:[%s2 + $0x10] sm:$0xff]
    %v313 = vld [vmem:[%s2 + $0x18] sm:$0xff]
    %v314 = vsel %vm200, %v305, 0
    %316 = vmatprep.subr.mxu0 0.0
    %317 = vmatpush1.msra.mxu0 %v310
    %318 = vmatprep.subr.mxu0 0.0
    %319 = vmatpush1.msra.mxu0 %v311
    %320 = vmatprep.subr.mxu0 0.0
    %321 = vmatpush1.msra.mxu0 %v312
    %322 = vmatprep.subr.mxu0 0.0
    %323 = vmatpush1.msra.mxu0 %v313
    %324 = vmatprep.subr.mxu0 0.0
    %325 = vmatpush1.msra.mxu0 0.0
    %326 = vmatprep.subr.mxu0 0.0
    %327 = vmatpush1.msra.mxu0 0.0
    %328 = vmatprep.subr.mxu0 0.0
    %329 = vmatpush1.msra.mxu0 0.0
    %330 = vmatprep.subr.mxu0 0.0
    %331 = vmatpush1.msra.mxu0 0.0
    %332 = vmatprep.subr.mxu0 0.0
    %333 = vmatpush1.msra.mxu0 0.0
    %334 = vmatprep.subr.mxu0 0.0
    %335 = vmatpush1.msra.mxu0 0.0
    %336 = vmatprep.subr.mxu0 0.0
    %337 = vmatpush1.msra.mxu0 0.0
    %338 = vmatprep.subr.mxu0 0.0
    %339 = vmatpush1.msra.mxu0 0.0
    %340 = vmatprep.subr.mxu0 0.0
    %341 = vmatpush1.msra.mxu0 0.0
    %342 = vmatprep.subr.mxu0 0.0
    %343 = vmatpush1.msra.mxu0 0.0
    %344 = vmatprep.subr.mxu0 0.0
    %345 = vmatpush1.msra.mxu0 0.0
    %346 = vmatprep.subr.mxu0 0.0
    %347 = vmatpush1.msra.mxu0 0.0
    %348 = vmatprep.subr.mxu0 0.0
    %349 = vmatpush1.msra.mxu0 0.0
    %350 = vmatprep.subr.mxu0 0.0
    %351 = vmatpush1.msra.mxu0 0.0
    %352 = vmatprep.subr.mxu0 0.0
    %353 = vmatpush1.msra.mxu0 0.0
    %354 = vmatprep.subr.mxu0 0.0
    %355 = vmatpush1.msra.mxu0 0.0
    %356 = vmatprep.subr.mxu0 0.0
    %357 = vmatpush1.msra.mxu0 0.0
    %358 = vmatprep.subr.mxu0 0.0
    %359 = vmatpush1.msra.mxu0 0.0
    %360 = vmatprep.subr.mxu0 0.0
    %361 = vmatpush1.msra.mxu0 0.0
    %362 = vmatprep.subr.mxu0 0.0
    %363 = vmatpush1.msra.mxu0 0.0
    %364 = vmatprep.subr.mxu0 0.0
    %365 = vmatpush1.msra.mxu0 0.0
    %366 = vmatprep.subr.mxu0 0.0
    %367 = vmatpush1.msra.mxu0 0.0
    %368 = vmatprep.subr.mxu0 0.0
    %369 = vmatpush1.msra.mxu0 0.0
    %370 = vmatprep.subr.mxu0 0.0
    %371 = vmatpush1.msra.mxu0 0.0
    %372 = vmatprep.subr.mxu0 0.0
    %373 = vmatpush1.msra.mxu0 0.0
    %374 = vmatprep.subr.mxu0 0.0
    %375 = vmatpush1.msra.mxu0 0.0
    %376 = vmatprep.subr.mxu0 0.0
    %377 = vmatpush1.msra.mxu0 0.0
    %378 = vmatprep.subr.mxu0 0.0
    %379 = vmatpush1.msra.mxu0 0.0
    %380 = vmatprep.mubr.f32.mxu0 0.0
    %381 = vmatmul.mubr.f32.gmra.mrb[0].mxu0 %v314
    %v382 = vpop.f32.mrb[0].mxu0
    %v383 = vadd.f32 0.0, %v382
    %v384 = vpop.f32.mrb[0].mxu0
    %385 = vdwg.mxu0
    %v386 = vadd.f32 %v309, %v383
    %v387 = vxor.u32 %v386, 2147483648
    %v388 = vmul.f32 %v387, 1.442695
    %v389 = vpow.pop %v388
    %v390 = vadd.f32 %v389, 1.0
    %v391 = vrcp.pop %v390
    %v392 = vmul.f32 1.0, %v391
    %v393 = vtanh.pop %v386
    %v394 = vmul.f32 %v392, %v296
    %396 = vrot.lane.b32.xlu0 %v393, 32
    %v397 = vpop.permute.xlu0 %396
    %v399 = vmul.f32 %v392, %v397
    %401 = vrot.lane.b32.xlu0 %v399, 32
    %v402 = vpop.permute.xlu0 %401
    %v404 = vadd.f32 %v394, %v402
    %v405 = vtanh.pop %v404
    %407 = vrot.lane.b32.xlu0 %v405, 32
    %v408 = vpop.permute.xlu0 %407
    %v410 = vmul.f32 %v392, %v408
    %412 = vrot.lane.b32.xlu0 %v410, 64
    %v413 = vpop.permute.xlu0 %412
    %s415 = scalar_lea.vmem [#allocation3], 8
    %416 = vst.msk [vmem:[%s415] sm:$0xff] %vm200, %v413
    %s417 = scalar_lea.vmem [#allocation2], 16
    %v418 = vld [vmem:[%s417] sm:$0xff]
    %v419 = vld [vmem:[%s2] sm:$0xff]
    %v420 = vld [vmem:[%s2 + $0x8] sm:$0xff]
    %v421 = vld [vmem:[%s2 + $0x10] sm:$0xff]
    %v422 = vld [vmem:[%s2 + $0x18] sm:$0xff]
    %v423 = vsel %vm200, %v413, 0
    %425 = vmatprep.subr.mxu0 0.0
    %426 = vmatpush1.msra.mxu0 %v419
    %427 = vmatprep.subr.mxu0 0.0
    %428 = vmatpush1.msra.mxu0 %v420
    %429 = vmatprep.subr.mxu0 0.0
    %430 = vmatpush1.msra.mxu0 %v421
    %431 = vmatprep.subr.mxu0 0.0
    %432 = vmatpush1.msra.mxu0 %v422
    %433 = vmatprep.subr.mxu0 0.0
    %434 = vmatpush1.msra.mxu0 0.0
    %435 = vmatprep.subr.mxu0 0.0
    %436 = vmatpush1.msra.mxu0 0.0
    %437 = vmatprep.subr.mxu0 0.0
    %438 = vmatpush1.msra.mxu0 0.0
    %439 = vmatprep.subr.mxu0 0.0
    %440 = vmatpush1.msra.mxu0 0.0
    %441 = vmatprep.subr.mxu0 0.0
    %442 = vmatpush1.msra.mxu0 0.0
    %443 = vmatprep.subr.mxu0 0.0
    %444 = vmatpush1.msra.mxu0 0.0
    %445 = vmatprep.subr.mxu0 0.0
    %446 = vmatpush1.msra.mxu0 0.0
    %447 = vmatprep.subr.mxu0 0.0
    %448 = vmatpush1.msra.mxu0 0.0
    %449 = vmatprep.subr.mxu0 0.0
    %450 = vmatpush1.msra.mxu0 0.0
    %451 = vmatprep.subr.mxu0 0.0
    %452 = vmatpush1.msra.mxu0 0.0
    %453 = vmatprep.subr.mxu0 0.0
    %454 = vmatpush1.msra.mxu0 0.0
    %455 = vmatprep.subr.mxu0 0.0
    %456 = vmatpush1.msra.mxu0 0.0
    %457 = vmatprep.subr.mxu0 0.0
    %458 = vmatpush1.msra.mxu0 0.0
    %459 = vmatprep.subr.mxu0 0.0
    %460 = vmatpush1.msra.mxu0 0.0
    %461 = vmatprep.subr.mxu0 0.0
    %462 = vmatpush1.msra.mxu0 0.0
    %463 = vmatprep.subr.mxu0 0.0
    %464 = vmatpush1.msra.mxu0 0.0
    %465 = vmatprep.subr.mxu0 0.0
    %466 = vmatpush1.msra.mxu0 0.0
    %467 = vmatprep.subr.mxu0 0.0
    %468 = vmatpush1.msra.mxu0 0.0
    %469 = vmatprep.subr.mxu0 0.0
    %470 = vmatpush1.msra.mxu0 0.0
    %471 = vmatprep.subr.mxu0 0.0
    %472 = vmatpush1.msra.mxu0 0.0
    %473 = vmatprep.subr.mxu0 0.0
    %474 = vmatpush1.msra.mxu0 0.0
    %475 = vmatprep.subr.mxu0 0.0
    %476 = vmatpush1.msra.mxu0 0.0
    %477 = vmatprep.subr.mxu0 0.0
    %478 = vmatpush1.msra.mxu0 0.0
    %479 = vmatprep.subr.mxu0 0.0
    %480 = vmatpush1.msra.mxu0 0.0
    %481 = vmatprep.subr.mxu0 0.0
    %482 = vmatpush1.msra.mxu0 0.0
    %483 = vmatprep.subr.mxu0 0.0
    %484 = vmatpush1.msra.mxu0 0.0
    %485 = vmatprep.subr.mxu0 0.0
    %486 = vmatpush1.msra.mxu0 0.0
    %487 = vmatprep.subr.mxu0 0.0
    %488 = vmatpush1.msra.mxu0 0.0
    %489 = vmatprep.mubr.f32.mxu0 0.0
    %490 = vmatmul.mubr.f32.gmra.mrb[0].mxu0 %v423
    %v491 = vpop.f32.mrb[0].mxu0
    %v492 = vadd.f32 0.0, %v491
    %v493 = vpop.f32.mrb[0].mxu0
    %494 = vdwg.mxu0
    %v495 = vadd.f32 %v418, %v492
    %v496 = vxor.u32 %v495, 2147483648
    %v497 = vmul.f32 %v496, 1.442695
    %v498 = vpow.pop %v497
    %v499 = vadd.f32 %v498, 1.0
    %v500 = vrcp.pop %v499
    %v501 = vmul.f32 1.0, %v500
    %v502 = vtanh.pop %v495
    %v503 = vmul.f32 %v501, %v404
    %505 = vrot.lane.b32.xlu0 %v502, 32
    %v506 = vpop.permute.xlu0 %505
    %v508 = vmul.f32 %v501, %v506
    %510 = vrot.lane.b32.xlu0 %v508, 32
    %v511 = vpop.permute.xlu0 %510
    %v513 = vadd.f32 %v503, %v511
    %v514 = vtanh.pop %v513
    %516 = vrot.lane.b32.xlu0 %v514, 32
    %v517 = vpop.permute.xlu0 %516
    %v519 = vmul.f32 %v501, %v517
    %521 = vrot.lane.b32.xlu0 %v519, 64
    %v522 = vpop.permute.xlu0 %521
    %s524 = scalar_lea.vmem [#allocation3], 16
    %525 = vst.msk [vmem:[%s524] sm:$0xff] %vm200, %v522
    %s526 = scalar_lea.vmem [#allocation2], 24
    %v527 = vld [vmem:[%s526] sm:$0xff]
    %v528 = vld [vmem:[%s2] sm:$0xff]
    %v529 = vld [vmem:[%s2 + $0x8] sm:$0xff]
    %v530 = vld [vmem:[%s2 + $0x10] sm:$0xff]
    %v531 = vld [vmem:[%s2 + $0x18] sm:$0xff]
    %v532 = vsel %vm200, %v522, 0
    %534 = vmatprep.subr.mxu0 0.0
    %535 = vmatpush1.msra.mxu0 %v528
    %536 = vmatprep.subr.mxu0 0.0
    %537 = vmatpush1.msra.mxu0 %v529
    %538 = vmatprep.subr.mxu0 0.0
    %539 = vmatpush1.msra.mxu0 %v530
    %540 = vmatprep.subr.mxu0 0.0
    %541 = vmatpush1.msra.mxu0 %v531
    %542 = vmatprep.subr.mxu0 0.0
    %543 = vmatpush1.msra.mxu0 0.0
    %544 = vmatprep.subr.mxu0 0.0
    %545 = vmatpush1.msra.mxu0 0.0
    %546 = vmatprep.subr.mxu0 0.0
    %547 = vmatpush1.msra.mxu0 0.0
    %548 = vmatprep.subr.mxu0 0.0
    %549 = vmatpush1.msra.mxu0 0.0
    %550 = vmatprep.subr.mxu0 0.0
    %551 = vmatpush1.msra.mxu0 0.0
    %552 = vmatprep.subr.mxu0 0.0
    %553 = vmatpush1.msra.mxu0 0.0
    %554 = vmatprep.subr.mxu0 0.0
    %555 = vmatpush1.msra.mxu0 0.0
    %556 = vmatprep.subr.mxu0 0.0
    %557 = vmatpush1.msra.mxu0 0.0
    %558 = vmatprep.subr.mxu0 0.0
    %559 = vmatpush1.msra.mxu0 0.0
    %560 = vmatprep.subr.mxu0 0.0
    %561 = vmatpush1.msra.mxu0 0.0
    %562 = vmatprep.subr.mxu0 0.0
    %563 = vmatpush1.msra.mxu0 0.0
    %564 = vmatprep.subr.mxu0 0.0
    %565 = vmatpush1.msra.mxu0 0.0
    %566 = vmatprep.subr.mxu0 0.0
    %567 = vmatpush1.msra.mxu0 0.0
    %568 = vmatprep.subr.mxu0 0.0
    %569 = vmatpush1.msra.mxu0 0.0
    %570 = vmatprep.subr.mxu0 0.0
    %571 = vmatpush1.msra.mxu0 0.0
    %572 = vmatprep.subr.mxu0 0.0
    %573 = vmatpush1.msra.mxu0 0.0
    %574 = vmatprep.subr.mxu0 0.0
    %575 = vmatpush1.msra.mxu0 0.0
    %576 = vmatprep.subr.mxu0 0.0
    %577 = vmatpush1.msra.mxu0 0.0
    %578 = vmatprep.subr.mxu0 0.0
    %579 = vmatpush1.msra.mxu0 0.0
    %580 = vmatprep.subr.mxu0 0.0
    %581 = vmatpush1.msra.mxu0 0.0
    %582 = vmatprep.subr.mxu0 0.0
    %583 = vmatpush1.msra.mxu0 0.0
    %584 = vmatprep.subr.mxu0 0.0
    %585 = vmatpush1.msra.mxu0 0.0
    %586 = vmatprep.subr.mxu0 0.0
    %587 = vmatpush1.msra.mxu0 0.0
    %588 = vmatprep.subr.mxu0 0.0
    %589 = vmatpush1.msra.mxu0 0.0
    %590 = vmatprep.subr.mxu0 0.0
    %591 = vmatpush1.msra.mxu0 0.0
    %592 = vmatprep.subr.mxu0 0.0
    %593 = vmatpush1.msra.mxu0 0.0
    %594 = vmatprep.subr.mxu0 0.0
    %595 = vmatpush1.msra.mxu0 0.0
    %596 = vmatprep.subr.mxu0 0.0
    %597 = vmatpush1.msra.mxu0 0.0
    %598 = vmatprep.mubr.f32.mxu0 0.0
    %599 = vmatmul.mubr.f32.gmra.mrb[0].mxu0 %v532
    %v600 = vpop.f32.mrb[0].mxu0
    %v601 = vadd.f32 0.0, %v600
    %v602 = vpop.f32.mrb[0].mxu0
    %603 = vdwg.mxu0
    %v604 = vadd.f32 %v527, %v601
    %v605 = vxor.u32 %v604, 2147483648
    %v606 = vmul.f32 %v605, 1.442695
    %v607 = vpow.pop %v606
    %v608 = vadd.f32 %v607, 1.0
    %v609 = vrcp.pop %v608
    %v610 = vmul.f32 1.0, %v609
    %v611 = vtanh.pop %v604
    %v612 = vmul.f32 %v610, %v513
    %614 = vrot.lane.b32.xlu0 %v611, 32
    %v615 = vpop.permute.xlu0 %614
    %v617 = vmul.f32 %v610, %v615
    %619 = vrot.lane.b32.xlu0 %v617, 32
    %v620 = vpop.permute.xlu0 %619
    %v622 = vadd.f32 %v612, %v620
    %v623 = vtanh.pop %v622
    %625 = vrot.lane.b32.xlu0 %v623, 32
    %v626 = vpop.permute.xlu0 %625
    %v628 = vmul.f32 %v610, %v626
    %630 = vrot.lane.b32.xlu0 %v628, 64
    %v631 = vpop.permute.xlu0 %630
    %s633 = scalar_lea.vmem [#allocation3], 24
    %634 = vst.msk [vmem:[%s633] sm:$0xff] %vm200, %v631
    %s635 = scalar_lea.vmem [#allocation2], 32
    %v636 = vld [vmem:[%s635] sm:$0xff]
    %v637 = vld [vmem:[%s2] sm:$0xff]
    %v638 = vld [vmem:[%s2 + $0x8] sm:$0xff]
    %v639 = vld [vmem:[%s2 + $0x10] sm:$0xff]
    %v640 = vld [vmem:[%s2 + $0x18] sm:$0xff]
    %v641 = vsel %vm200, %v631, 0
    %643 = vmatprep.subr.mxu0 0.0
    %644 = vmatpush1.msra.mxu0 %v637
    %645 = vmatprep.subr.mxu0 0.0
    %646 = vmatpush1.msra.mxu0 %v638
    %647 = vmatprep.subr.mxu0 0.0
    %648 = vmatpush1.msra.mxu0 %v639
    %649 = vmatprep.subr.mxu0 0.0
    %650 = vmatpush1.msra.mxu0 %v640
    %651 = vmatprep.subr.mxu0 0.0
    %652 = vmatpush1.msra.mxu0 0.0
    %653 = vmatprep.subr.mxu0 0.0
    %654 = vmatpush1.msra.mxu0 0.0
    %655 = vmatprep.subr.mxu0 0.0
    %656 = vmatpush1.msra.mxu0 0.0
    %657 = vmatprep.subr.mxu0 0.0
    %658 = vmatpush1.msra.mxu0 0.0
    %659 = vmatprep.subr.mxu0 0.0
    %660 = vmatpush1.msra.mxu0 0.0
    %661 = vmatprep.subr.mxu0 0.0
    %662 = vmatpush1.msra.mxu0 0.0
    %663 = vmatprep.subr.mxu0 0.0
    %664 = vmatpush1.msra.mxu0 0.0
    %665 = vmatprep.subr.mxu0 0.0
    %666 = vmatpush1.msra.mxu0 0.0
    %667 = vmatprep.subr.mxu0 0.0
    %668 = vmatpush1.msra.mxu0 0.0
    %669 = vmatprep.subr.mxu0 0.0
    %670 = vmatpush1.msra.mxu0 0.0
    %671 = vmatprep.subr.mxu0 0.0
    %672 = vmatpush1.msra.mxu0 0.0
    %673 = vmatprep.subr.mxu0 0.0
    %674 = vmatpush1.msra.mxu0 0.0
    %675 = vmatprep.subr.mxu0 0.0
    %676 = vmatpush1.msra.mxu0 0.0
    %677 = vmatprep.subr.mxu0 0.0
    %678 = vmatpush1.msra.mxu0 0.0
    %679 = vmatprep.subr.mxu0 0.0
    %680 = vmatpush1.msra.mxu0 0.0
    %681 = vmatprep.subr.mxu0 0.0
    %682 = vmatpush1.msra.mxu0 0.0
    %683 = vmatprep.subr.mxu0 0.0
    %684 = vmatpush1.msra.mxu0 0.0
    %685 = vmatprep.subr.mxu0 0.0
    %686 = vmatpush1.msra.mxu0 0.0
    %687 = vmatprep.subr.mxu0 0.0
    %688 = vmatpush1.msra.mxu0 0.0
    %689 = vmatprep.subr.mxu0 0.0
    %690 = vmatpush1.msra.mxu0 0.0
    %691 = vmatprep.subr.mxu0 0.0
    %692 = vmatpush1.msra.mxu0 0.0
    %693 = vmatprep.subr.mxu0 0.0
    %694 = vmatpush1.msra.mxu0 0.0
    %695 = vmatprep.subr.mxu0 0.0
    %696 = vmatpush1.msra.mxu0 0.0
    %697 = vmatprep.subr.mxu0 0.0
    %698 = vmatpush1.msra.mxu0 0.0
    %699 = vmatprep.subr.mxu0 0.0
    %700 = vmatpush1.msra.mxu0 0.0
    %701 = vmatprep.subr.mxu0 0.0
    %702 = vmatpush1.msra.mxu0 0.0
    %703 = vmatprep.subr.mxu0 0.0
    %704 = vmatpush1.msra.mxu0 0.0
    %705 = vmatprep.subr.mxu0 0.0
    %706 = vmatpush1.msra.mxu0 0.0
    %707 = vmatprep.mubr.f32.mxu0 0.0
    %708 = vmatmul.mubr.f32.gmra.mrb[0].mxu0 %v641
    %v709 = vpop.f32.mrb[0].mxu0
    %v710 = vadd.f32 0.0, %v709
    %v711 = vpop.f32.mrb[0].mxu0
    %712 = vdwg.mxu0
    %v713 = vadd.f32 %v636, %v710
    %v714 = vxor.u32 %v713, 2147483648
    %v715 = vmul.f32 %v714, 1.442695
    %v716 = vpow.pop %v715
    %v717 = vadd.f32 %v716, 1.0
    %v718 = vrcp.pop %v717
    %v719 = vmul.f32 1.0, %v718
    %v720 = vtanh.pop %v713
    %v721 = vmul.f32 %v719, %v622
    %723 = vrot.lane.b32.xlu0 %v720, 32
    %v724 = vpop.permute.xlu0 %723
    %v726 = vmul.f32 %v719, %v724
    %728 = vrot.lane.b32.xlu0 %v726, 32
    %v729 = vpop.permute.xlu0 %728
    %v731 = vadd.f32 %v721, %v729
    %v732 = vtanh.pop %v731
    %734 = vrot.lane.b32.xlu0 %v732, 32
    %v735 = vpop.permute.xlu0 %734
    %v737 = vmul.f32 %v719, %v735
    %739 = vrot.lane.b32.xlu0 %v737, 64
    %v740 = vpop.permute.xlu0 %739
    %s742 = scalar_lea.vmem [#allocation3], 32
    %743 = vst.msk [vmem:[%s742] sm:$0xff] %vm200, %v740
    %s744 = scalar_lea.vmem [#allocation2], 40
    %v745 = vld [vmem:[%s744] sm:$0xff]
    %v746 = vld [vmem:[%s2] sm:$0xff]
    %v747 = vld [vmem:[%s2 + $0x8] sm:$0xff]
    %v748 = vld [vmem:[%s2 + $0x10] sm:$0xff]
    %v749 = vld [vmem:[%s2 + $0x18] sm:$0xff]
    %v750 = vsel %vm200, %v740, 0
    %752 = vmatprep.subr.mxu0 0.0
    %753 = vmatpush1.msra.mxu0 %v746
    %754 = vmatprep.subr.mxu0 0.0
    %755 = vmatpush1.msra.mxu0 %v747
    %756 = vmatprep.subr.mxu0 0.0
    %757 = vmatpush1.msra.mxu0 %v748
    %758 = vmatprep.subr.mxu0 0.0
    %759 = vmatpush1.msra.mxu0 %v749
    %760 = vmatprep.subr.mxu0 0.0
    %761 = vmatpush1.msra.mxu0 0.0
    %762 = vmatprep.subr.mxu0 0.0
    %763 = vmatpush1.msra.mxu0 0.0
    %764 = vmatprep.subr.mxu0 0.0
    %765 = vmatpush1.msra.mxu0 0.0
    %766 = vmatprep.subr.mxu0 0.0
    %767 = vmatpush1.msra.mxu0 0.0
    %768 = vmatprep.subr.mxu0 0.0
    %769 = vmatpush1.msra.mxu0 0.0
    %770 = vmatprep.subr.mxu0 0.0
    %771 = vmatpush1.msra.mxu0 0.0
    %772 = vmatprep.subr.mxu0 0.0
    %773 = vmatpush1.msra.mxu0 0.0
    %774 = vmatprep.subr.mxu0 0.0
    %775 = vmatpush1.msra.mxu0 0.0
    %776 = vmatprep.subr.mxu0 0.0
    %777 = vmatpush1.msra.mxu0 0.0
    %778 = vmatprep.subr.mxu0 0.0
    %779 = vmatpush1.msra.mxu0 0.0
    %780 = vmatprep.subr.mxu0 0.0
    %781 = vmatpush1.msra.mxu0 0.0
    %782 = vmatprep.subr.mxu0 0.0
    %783 = vmatpush1.msra.mxu0 0.0
    %784 = vmatprep.subr.mxu0 0.0
    %785 = vmatpush1.msra.mxu0 0.0
    %786 = vmatprep.subr.mxu0 0.0
    %787 = vmatpush1.msra.mxu0 0.0
    %788 = vmatprep.subr.mxu0 0.0
    %789 = vmatpush1.msra.mxu0 0.0
    %790 = vmatprep.subr.mxu0 0.0
    %791 = vmatpush1.msra.mxu0 0.0
    %792 = vmatprep.subr.mxu0 0.0
    %793 = vmatpush1.msra.mxu0 0.0
    %794 = vmatprep.subr.mxu0 0.0
    %795 = vmatpush1.msra.mxu0 0.0
    %796 = vmatprep.subr.mxu0 0.0
    %797 = vmatpush1.msra.mxu0 0.0
    %798 = vmatprep.subr.mxu0 0.0
    %799 = vmatpush1.msra.mxu0 0.0
    %800 = vmatprep.subr.mxu0 0.0
    %801 = vmatpush1.msra.mxu0 0.0
    %802 = vmatprep.subr.mxu0 0.0
    %803 = vmatpush1.msra.mxu0 0.0
    %804 = vmatprep.subr.mxu0 0.0
    %805 = vmatpush1.msra.mxu0 0.0
    %806 = vmatprep.subr.mxu0 0.0
    %807 = vmatpush1.msra.mxu0 0.0
    %808 = vmatprep.subr.mxu0 0.0
    %809 = vmatpush1.msra.mxu0 0.0
    %810 = vmatprep.subr.mxu0 0.0
    %811 = vmatpush1.msra.mxu0 0.0
    %812 = vmatprep.subr.mxu0 0.0
    %813 = vmatpush1.msra.mxu0 0.0
    %814 = vmatprep.subr.mxu0 0.0
    %815 = vmatpush1.msra.mxu0 0.0
    %816 = vmatprep.mubr.f32.mxu0 0.0
    %817 = vmatmul.mubr.f32.gmra.mrb[0].mxu0 %v750
    %v818 = vpop.f32.mrb[0].mxu0
    %v819 = vadd.f32 0.0, %v818
    %v820 = vpop.f32.mrb[0].mxu0
    %821 = vdwg.mxu0
    %v822 = vadd.f32 %v745, %v819
    %v823 = vxor.u32 %v822, 2147483648
    %v824 = vmul.f32 %v823, 1.442695
    %v825 = vpow.pop %v824
    %v826 = vadd.f32 %v825, 1.0
    %v827 = vrcp.pop %v826
    %v828 = vmul.f32 1.0, %v827
    %v829 = vtanh.pop %v822
    %v830 = vmul.f32 %v828, %v731
    %832 = vrot.lane.b32.xlu0 %v829, 32
    %v833 = vpop.permute.xlu0 %832
    %v835 = vmul.f32 %v828, %v833
    %837 = vrot.lane.b32.xlu0 %v835, 32
    %v838 = vpop.permute.xlu0 %837
    %v840 = vadd.f32 %v830, %v838
    %v841 = vtanh.pop %v840
    %843 = vrot.lane.b32.xlu0 %v841, 32
    %v844 = vpop.permute.xlu0 %843
    %v846 = vmul.f32 %v828, %v844
    %848 = vrot.lane.b32.xlu0 %v846, 64
    %v849 = vpop.permute.xlu0 %848
    %s851 = scalar_lea.vmem [#allocation3], 40
    %852 = vst.msk [vmem:[%s851] sm:$0xff] %vm200, %v849
    %s853 = scalar_lea.vmem [#allocation2], 48
    %v854 = vld [vmem:[%s853] sm:$0xff]
    %v855 = vld [vmem:[%s2] sm:$0xff]
    %v856 = vld [vmem:[%s2 + $0x8] sm:$0xff]
    %v857 = vld [vmem:[%s2 + $0x10] sm:$0xff]
    %v858 = vld [vmem:[%s2 + $0x18] sm:$0xff]
    %v859 = vsel %vm200, %v849, 0
    %861 = vmatprep.subr.mxu0 0.0
    %862 = vmatpush1.msra.mxu0 %v855
    %863 = vmatprep.subr.mxu0 0.0
    %864 = vmatpush1.msra.mxu0 %v856
    %865 = vmatprep.subr.mxu0 0.0
    %866 = vmatpush1.msra.mxu0 %v857
    %867 = vmatprep.subr.mxu0 0.0
    %868 = vmatpush1.msra.mxu0 %v858
    %869 = vmatprep.subr.mxu0 0.0
    %870 = vmatpush1.msra.mxu0 0.0
    %871 = vmatprep.subr.mxu0 0.0
    %872 = vmatpush1.msra.mxu0 0.0
    %873 = vmatprep.subr.mxu0 0.0
    %874 = vmatpush1.msra.mxu0 0.0
    %875 = vmatprep.subr.mxu0 0.0
    %876 = vmatpush1.msra.mxu0 0.0
    %877 = vmatprep.subr.mxu0 0.0
    %878 = vmatpush1.msra.mxu0 0.0
    %879 = vmatprep.subr.mxu0 0.0
    %880 = vmatpush1.msra.mxu0 0.0
    %881 = vmatprep.subr.mxu0 0.0
    %882 = vmatpush1.msra.mxu0 0.0
    %883 = vmatprep.subr.mxu0 0.0
    %884 = vmatpush1.msra.mxu0 0.0
    %885 = vmatprep.subr.mxu0 0.0
    %886 = vmatpush1.msra.mxu0 0.0
    %887 = vmatprep.subr.mxu0 0.0
    %888 = vmatpush1.msra.mxu0 0.0
    %889 = vmatprep.subr.mxu0 0.0
    %890 = vmatpush1.msra.mxu0 0.0
    %891 = vmatprep.subr.mxu0 0.0
    %892 = vmatpush1.msra.mxu0 0.0
    %893 = vmatprep.subr.mxu0 0.0
    %894 = vmatpush1.msra.mxu0 0.0
    %895 = vmatprep.subr.mxu0 0.0
    %896 = vmatpush1.msra.mxu0 0.0
    %897 = vmatprep.subr.mxu0 0.0
    %898 = vmatpush1.msra.mxu0 0.0
    %899 = vmatprep.subr.mxu0 0.0
    %900 = vmatpush1.msra.mxu0 0.0
    %901 = vmatprep.subr.mxu0 0.0
    %902 = vmatpush1.msra.mxu0 0.0
    %903 = vmatprep.subr.mxu0 0.0
    %904 = vmatpush1.msra.mxu0 0.0
    %905 = vmatprep.subr.mxu0 0.0
    %906 = vmatpush1.msra.mxu0 0.0
    %907 = vmatprep.subr.mxu0 0.0
    %908 = vmatpush1.msra.mxu0 0.0
    %909 = vmatprep.subr.mxu0 0.0
    %910 = vmatpush1.msra.mxu0 0.0
    %911 = vmatprep.subr.mxu0 0.0
    %912 = vmatpush1.msra.mxu0 0.0
    %913 = vmatprep.subr.mxu0 0.0
    %914 = vmatpush1.msra.mxu0 0.0
    %915 = vmatprep.subr.mxu0 0.0
    %916 = vmatpush1.msra.mxu0 0.0
    %917 = vmatprep.subr.mxu0 0.0
    %918 = vmatpush1.msra.mxu0 0.0
    %919 = vmatprep.subr.mxu0 0.0
    %920 = vmatpush1.msra.mxu0 0.0
    %921 = vmatprep.subr.mxu0 0.0
    %922 = vmatpush1.msra.mxu0 0.0
    %923 = vmatprep.subr.mxu0 0.0
    %924 = vmatpush1.msra.mxu0 0.0
    %925 = vmatprep.mubr.f32.mxu0 0.0
    %926 = vmatmul.mubr.f32.gmra.mrb[0].mxu0 %v859
    %v927 = vpop.f32.mrb[0].mxu0
    %v928 = vadd.f32 0.0, %v927
    %v929 = vpop.f32.mrb[0].mxu0
    %930 = vdwg.mxu0
    %v931 = vadd.f32 %v854, %v928
    %v932 = vxor.u32 %v931, 2147483648
    %v933 = vmul.f32 %v932, 1.442695
    %v934 = vpow.pop %v933
    %v935 = vadd.f32 %v934, 1.0
    %v936 = vrcp.pop %v935
    %v937 = vmul.f32 1.0, %v936
    %v938 = vtanh.pop %v931
    %v939 = vmul.f32 %v937, %v840
    %941 = vrot.lane.b32.xlu0 %v938, 32
    %v942 = vpop.permute.xlu0 %941
    %v944 = vmul.f32 %v937, %v942
    %946 = vrot.lane.b32.xlu0 %v944, 32
    %v947 = vpop.permute.xlu0 %946
    %v949 = vadd.f32 %v939, %v947
    %v950 = vtanh.pop %v949
    %952 = vrot.lane.b32.xlu0 %v950, 32
    %v953 = vpop.permute.xlu0 %952
    %v955 = vmul.f32 %v937, %v953
    %957 = vrot.lane.b32.xlu0 %v955, 64
    %v958 = vpop.permute.xlu0 %957
    %s960 = scalar_lea.vmem [#allocation3], 48
    %961 = vst.msk [vmem:[%s960] sm:$0xff] %vm200, %v958
    %s962 = scalar_lea.vmem [#allocation2], 56
    %v963 = vld [vmem:[%s962] sm:$0xff]
    %v964 = vld [vmem:[%s2] sm:$0xff]
    %v965 = vld [vmem:[%s2 + $0x8] sm:$0xff]
    %v966 = vld [vmem:[%s2 + $0x10] sm:$0xff]
    %v967 = vld [vmem:[%s2 + $0x18] sm:$0xff]
    %v968 = vsel %vm200, %v958, 0
    %970 = vmatprep.subr.mxu0 0.0
    %971 = vmatpush1.msra.mxu0 %v964
    %972 = vmatprep.subr.mxu0 0.0
    %973 = vmatpush1.msra.mxu0 %v965
    %974 = vmatprep.subr.mxu0 0.0
    %975 = vmatpush1.msra.mxu0 %v966
    %976 = vmatprep.subr.mxu0 0.0
    %977 = vmatpush1.msra.mxu0 %v967
    %978 = vmatprep.subr.mxu0 0.0
    %979 = vmatpush1.msra.mxu0 0.0
    %980 = vmatprep.subr.mxu0 0.0
    %981 = vmatpush1.msra.mxu0 0.0
    %982 = vmatprep.subr.mxu0 0.0
    %983 = vmatpush1.msra.mxu0 0.0
    %984 = vmatprep.subr.mxu0 0.0
    %985 = vmatpush1.msra.mxu0 0.0
    %986 = vmatprep.subr.mxu0 0.0
    %987 = vmatpush1.msra.mxu0 0.0
    %988 = vmatprep.subr.mxu0 0.0
    %989 = vmatpush1.msra.mxu0 0.0
    %990 = vmatprep.subr.mxu0 0.0
    %991 = vmatpush1.msra.mxu0 0.0
    %992 = vmatprep.subr.mxu0 0.0
    %993 = vmatpush1.msra.mxu0 0.0
    %994 = vmatprep.subr.mxu0 0.0
    %995 = vmatpush1.msra.mxu0 0.0
    %996 = vmatprep.subr.mxu0 0.0
    %997 = vmatpush1.msra.mxu0 0.0
    %998 = vmatprep.subr.mxu0 0.0
    %999 = vmatpush1.msra.mxu0 0.0
    %1000 = vmatprep.subr.mxu0 0.0
    %1001 = vmatpush1.msra.mxu0 0.0
    %1002 = vmatprep.subr.mxu0 0.0
    %1003 = vmatpush1.msra.mxu0 0.0
    %1004 = vmatprep.subr.mxu0 0.0
    %1005 = vmatpush1.msra.mxu0 0.0
    %1006 = vmatprep.subr.mxu0 0.0
    %1007 = vmatpush1.msra.mxu0 0.0
    %1008 = vmatprep.subr.mxu0 0.0
    %1009 = vmatpush1.msra.mxu0 0.0
    %1010 = vmatprep.subr.mxu0 0.0
    %1011 = vmatpush1.msra.mxu0 0.0
    %1012 = vmatprep.subr.mxu0 0.0
    %1013 = vmatpush1.msra.mxu0 0.0
    %1014 = vmatprep.subr.mxu0 0.0
    %1015 = vmatpush1.msra.mxu0 0.0
    %1016 = vmatprep.subr.mxu0 0.0
    %1017 = vmatpush1.msra.mxu0 0.0
    %1018 = vmatprep.subr.mxu0 0.0
    %1019 = vmatpush1.msra.mxu0 0.0
    %1020 = vmatprep.subr.mxu0 0.0
    %1021 = vmatpush1.msra.mxu0 0.0
    %1022 = vmatprep.subr.mxu0 0.0
    %1023 = vmatpush1.msra.mxu0 0.0
    %1024 = vmatprep.subr.mxu0 0.0
    %1025 = vmatpush1.msra.mxu0 0.0
    %1026 = vmatprep.subr.mxu0 0.0
    %1027 = vmatpush1.msra.mxu0 0.0
    %1028 = vmatprep.subr.mxu0 0.0
    %1029 = vmatpush1.msra.mxu0 0.0
    %1030 = vmatprep.subr.mxu0 0.0
    %1031 = vmatpush1.msra.mxu0 0.0
    %1032 = vmatprep.subr.mxu0 0.0
    %1033 = vmatpush1.msra.mxu0 0.0
    %1034 = vmatprep.mubr.f32.mxu0 0.0
    %1035 = vmatmul.mubr.f32.gmra.mrb[0].mxu0 %v968
    %v1036 = vpop.f32.mrb[0].mxu0
    %v1037 = vadd.f32 0.0, %v1036
    %v1038 = vpop.f32.mrb[0].mxu0
    %1039 = vdwg.mxu0
    %v1040 = vadd.f32 %v963, %v1037
    %v1041 = vxor.u32 %v1040, 2147483648
    %v1042 = vmul.f32 %v1041, 1.442695
    %v1043 = vpow.pop %v1042
    %v1044 = vadd.f32 %v1043, 1.0
    %v1045 = vrcp.pop %v1044
    %v1046 = vmul.f32 1.0, %v1045
    %v1047 = vtanh.pop %v1040
    %v1048 = vmul.f32 %v1046, %v949
    %1050 = vrot.lane.b32.xlu0 %v1047, 32
    %v1051 = vpop.permute.xlu0 %1050
    %v1053 = vmul.f32 %v1046, %v1051
    %1055 = vrot.lane.b32.xlu0 %v1053, 32
    %v1056 = vpop.permute.xlu0 %1055
    %v1058 = vadd.f32 %v1048, %v1056
    %v1059 = vtanh.pop %v1058
    %1061 = vrot.lane.b32.xlu0 %v1059, 32
    %v1062 = vpop.permute.xlu0 %1061
    %v1064 = vmul.f32 %v1046, %v1062
    %1066 = vrot.lane.b32.xlu0 %v1064, 64
    %v1067 = vpop.permute.xlu0 %1066
    %s1069 = scalar_lea.vmem [#allocation3], 56
    %1070 = vst.msk [vmem:[%s1069] sm:$0xff] %vm200, %v1067
    %1071 = vst.msk [vmem:[#allocation4] sm:$0xff] %vm200, %v1067
    %1073 = vrot.lane.b32.xlu0 %v1058, 96
    %v1074 = vpop.permute.xlu0 %1073
    %1076 = vst.msk [vmem:[#allocation5] sm:$0xff] %vm200, %v1074
    // Predicated region
    $region30: #{tpu_custom_call.1} parent=1 // pred_check
      %p1077 = pneg %p28
    $region31: #{tpu_custom_call.1} parent=1 // pred_check_branch
      %1079 = sbr.rel (%p1077) target = $region33
    $region32: #{tpu_custom_call.1} parent=1 // pred_region
      %1080 = vst.msk [vmem:[#allocation8] sm:$0xff] %vm200, %v1067
      %1081 = vst.msk [vmem:[#allocation10] sm:$0xff] %vm200, %v1074
    $region33: #{tpu_custom_call.1} parent=1 // pred_fallthru
      _
    %v1082 = vld [vmem:[#allocation3] sm:$0xff]
    %v1083 = vld [vmem:[#allocation3 + $0x8] sm:$0xff]
    %v1084 = vld [vmem:[#allocation3 + $0x10] sm:$0xff]
    %v1085 = vld [vmem:[#allocation3 + $0x18] sm:$0xff]
    %v1086 = vld [vmem:[#allocation3 + $0x20] sm:$0xff]
    %v1087 = vld [vmem:[#allocation3 + $0x28] sm:$0xff]
    %v1088 = vld [vmem:[#allocation3 + $0x30] sm:$0xff]
    %v1089 = vld [vmem:[#allocation3 + $0x38] sm:$0xff]
    %v1090 = vld [vmem:[%s4] sm:$0xff]
    %v1091 = vld [vmem:[%s4 + $0x8] sm:$0xff]
    %v1092 = vld [vmem:[%s4 + $0x10] sm:$0xff]
    %v1093 = vld [vmem:[%s4 + $0x18] sm:$0xff]
    %v1094 = vld [vmem:[%s5] sm:$0x1]
    %v1096 = vlaneseq
    %v1097 = vshrl.u32 %v1096, 7
    %v1098 = vsub.s32 0, %v1097
    %v1099 = vrot.slane %v1094, %v1098
    %v1102 = vsel %vm200, %v1082, 0
    %v1105 = vsel %vm200, %v1083, 0
    %v1108 = vsel %vm200, %v1084, 0
    %v1111 = vsel %vm200, %v1085, 0
    %v1114 = vsel %vm200, %v1086, 0
    %v1117 = vsel %vm200, %v1087, 0
    %v1120 = vsel %vm200, %v1088, 0
    %v1123 = vsel %vm200, %v1089, 0
    %1125 = vmatprep.subr.mxu0 0.0
    %1126 = vmatpush1.msra.mxu0 %v1090
    %1127 = vmatprep.subr.mxu0 0.0
    %1128 = vmatpush1.msra.mxu0 %v1091
    %1129 = vmatprep.subr.mxu0 0.0
    %1130 = vmatpush1.msra.mxu0 %v1092
    %1131 = vmatprep.subr.mxu0 0.0
    %1132 = vmatpush1.msra.mxu0 %v1093
    %1133 = vmatprep.subr.mxu0 0.0
    %1134 = vmatpush1.msra.mxu0 0.0
    %1135 = vmatprep.subr.mxu0 0.0
    %1136 = vmatpush1.msra.mxu0 0.0
    %1137 = vmatprep.subr.mxu0 0.0
    %1138 = vmatpush1.msra.mxu0 0.0
    %1139 = vmatprep.subr.mxu0 0.0
    %1140 = vmatpush1.msra.mxu0 0.0
    %1141 = vmatprep.subr.mxu0 0.0
    %1142 = vmatpush1.msra.mxu0 0.0
    %1143 = vmatprep.subr.mxu0 0.0
    %1144 = vmatpush1.msra.mxu0 0.0
    %1145 = vmatprep.subr.mxu0 0.0
    %1146 = vmatpush1.msra.mxu0 0.0
    %1147 = vmatprep.subr.mxu0 0.0
    %1148 = vmatpush1.msra.mxu0 0.0
    %1149 = vmatprep.subr.mxu0 0.0
    %1150 = vmatpush1.msra.mxu0 0.0
    %1151 = vmatprep.subr.mxu0 0.0
    %1152 = vmatpush1.msra.mxu0 0.0
    %1153 = vmatprep.subr.mxu0 0.0
    %1154 = vmatpush1.msra.mxu0 0.0
    %1155 = vmatprep.subr.mxu0 0.0
    %1156 = vmatpush1.msra.mxu0 0.0
    %1157 = vmatprep.subr.mxu0 0.0
    %1158 = vmatpush1.msra.mxu0 0.0
    %1159 = vmatprep.subr.mxu0 0.0
    %1160 = vmatpush1.msra.mxu0 0.0
    %1161 = vmatprep.subr.mxu0 0.0
    %1162 = vmatpush1.msra.mxu0 0.0
    %1163 = vmatprep.subr.mxu0 0.0
    %1164 = vmatpush1.msra.mxu0 0.0
    %1165 = vmatprep.subr.mxu0 0.0
    %1166 = vmatpush1.msra.mxu0 0.0
    %1167 = vmatprep.subr.mxu0 0.0
    %1168 = vmatpush1.msra.mxu0 0.0
    %1169 = vmatprep.subr.mxu0 0.0
    %1170 = vmatpush1.msra.mxu0 0.0
    %1171 = vmatprep.subr.mxu0 0.0
    %1172 = vmatpush1.msra.mxu0 0.0
    %1173 = vmatprep.subr.mxu0 0.0
    %1174 = vmatpush1.msra.mxu0 0.0
    %1175 = vmatprep.subr.mxu0 0.0
    %1176 = vmatpush1.msra.mxu0 0.0
    %1177 = vmatprep.subr.mxu0 0.0
    %1178 = vmatpush1.msra.mxu0 0.0
    %1179 = vmatprep.subr.mxu0 0.0
    %1180 = vmatpush1.msra.mxu0 0.0
    %1181 = vmatprep.subr.mxu0 0.0
    %1182 = vmatpush1.msra.mxu0 0.0
    %1183 = vmatprep.subr.mxu0 0.0
    %1184 = vmatpush1.msra.mxu0 0.0
    %1185 = vmatprep.subr.mxu0 0.0
    %1186 = vmatpush1.msra.mxu0 0.0
    %1187 = vmatprep.subr.mxu0 0.0
    %1188 = vmatpush1.msra.mxu0 0.0
    %1189 = vmatprep.mubr.f32.mxu0 0.0
    %1190 = vmatmul.mubr.f32.gmra.mrb[0].mxu0 %v1102
    %v1191 = vpop.f32.mrb[0].mxu0
    %v1192 = vadd.f32 %v1099, %v1191
    %v1193 = vpop.f32.mrb[0].mxu0
    %1194 = vmatprep.mubr.f32.mxu0 0.0
    %1195 = vmatmul.mubr.f32.gmra.mrb[0].mxu0 %v1105
    %v1196 = vpop.f32.mrb[0].mxu0
    %v1197 = vadd.f32 %v1099, %v1196
    %v1198 = vpop.f32.mrb[0].mxu0
    %1199 = vmatprep.mubr.f32.mxu0 0.0
    %1200 = vmatmul.mubr.f32.gmra.mrb[0].mxu0 %v1108
    %v1201 = vpop.f32.mrb[0].mxu0
    %v1202 = vadd.f32 %v1099, %v1201
    %v1203 = vpop.f32.mrb[0].mxu0
    %1204 = vmatprep.mubr.f32.mxu0 0.0
    %1205 = vmatmul.mubr.f32.gmra.mrb[0].mxu0 %v1111
    %v1206 = vpop.f32.mrb[0].mxu0
    %v1207 = vadd.f32 %v1099, %v1206
    %v1208 = vpop.f32.mrb[0].mxu0
    %1209 = vmatprep.mubr.f32.mxu0 0.0
    %1210 = vmatmul.mubr.f32.gmra.mrb[0].mxu0 %v1114
    %v1211 = vpop.f32.mrb[0].mxu0
    %v1212 = vadd.f32 %v1099, %v1211
    %v1213 = vpop.f32.mrb[0].mxu0
    %1214 = vmatprep.mubr.f32.mxu0 0.0
    %1215 = vmatmul.mubr.f32.gmra.mrb[0].mxu0 %v1117
    %v1216 = vpop.f32.mrb[0].mxu0
    %v1217 = vadd.f32 %v1099, %v1216
    %v1218 = vpop.f32.mrb[0].mxu0
    %1219 = vmatprep.mubr.f32.mxu0 0.0
    %1220 = vmatmul.mubr.f32.gmra.mrb[0].mxu0 %v1120
    %v1221 = vpop.f32.mrb[0].mxu0
    %v1222 = vadd.f32 %v1099, %v1221
    %v1223 = vpop.f32.mrb[0].mxu0
    %1224 = vmatprep.mubr.f32.mxu0 0.0
    %1225 = vmatmul.mubr.f32.gmra.mrb[0].mxu0 %v1123
    %v1226 = vpop.f32.mrb[0].mxu0
    %v1227 = vadd.f32 %v1099, %v1226
    %v1228 = vpop.f32.mrb[0].mxu0
    %1229 = vdwg.mxu0
    %1230 = vst [vmem:[#allocation6] sm:$0xff] %v1192
    %1231 = vst [vmem:[#allocation6 + $0x8] sm:$0xff] %v1197
    %1232 = vst [vmem:[#allocation6 + $0x10] sm:$0xff] %v1202
    %1233 = vst [vmem:[#allocation6 + $0x18] sm:$0xff] %v1207
    %1234 = vst [vmem:[#allocation6 + $0x20] sm:$0xff] %v1212
    %1235 = vst [vmem:[#allocation6 + $0x28] sm:$0xff] %v1217
    %1236 = vst [vmem:[#allocation6 + $0x30] sm:$0xff] %v1222
    %1237 = vst [vmem:[#allocation6 + $0x38] sm:$0xff] %v1227
    // Predicated region
    $region34: #{tpu_custom_call.1} parent=1 // pred_check
      _
    $region35: #{tpu_custom_call.1} parent=1 // pred_check_branch
      %1239 = sbr.rel (0) target = $region37
    $region36: #{tpu_custom_call.1} parent=1 // pred_region
      %s1241 = ssub.s32 1024, 1024
      %1242 = vsyncadd [#allocation7], %s1241
      %s1243 = sshll.u32 [#allocation6], 4
      %s1244 = int_to_ptr.vmem [resolvable:$true] %s1243
      %1249 = dma.vmem_to_hbm [thread:$0]  %s1244, 1024, %s6, [#allocation7], 128, 128, 8
    $region37: #{tpu_custom_call.1} parent=1 // pred_fallthru
      _
    // Predicated region
    $region38: #{tpu_custom_call.1} parent=1 // pred_check
      _
    $region39: #{tpu_custom_call.1} parent=1 // pred_check_branch
      %1251 = sbr.rel (0) target = $region41
    $region40: #{tpu_custom_call.1} parent=1 // pred_region
      %s1253 = ssub.s32 128, 128
      %1254 = vsyncadd [#allocation9], %s1253
      %s1256 = sshll.u32 [#allocation8], 4
      %s1257 = int_to_ptr.vmem [resolvable:$true] %s1256
      %1259 = dma.vmem_to_hbm [thread:$0]  %s1257, 128, %s7, [#allocation9]
    $region41: #{tpu_custom_call.1} parent=1 // pred_fallthru
      _
    // Predicated region
    $region42: #{tpu_custom_call.1} parent=1 // pred_check
      _
    $region43: #{tpu_custom_call.1} parent=1 // pred_check_branch
      %1261 = sbr.rel (0) target = $region45
    $region44: #{tpu_custom_call.1} parent=1 // pred_region
      %s1263 = ssub.s32 128, 128
      %1264 = vsyncadd [#allocation9], %s1263
      %s1266 = sshll.u32 [#allocation10], 4
      %s1267 = int_to_ptr.vmem [resolvable:$true] %s1266
      %1269 = dma.vmem_to_hbm [thread:$0]  %s1267, 128, %s8, [#allocation9]
    $region45: #{tpu_custom_call.1} parent=1 // pred_fallthru
      _
    // Predicated region
    $region46: #{tpu_custom_call.1} parent=1 // pred_check
      _
    $region47: #{tpu_custom_call.1} parent=1 // pred_check_branch
      %1271 = sbr.rel (0) target = $region49
    $region48: #{tpu_custom_call.1} parent=1 // pred_region
      %1272 = dma.done [#allocation7], 1024
    $region49: #{tpu_custom_call.1} parent=1 // pred_fallthru
      _
    // Predicated region
    $region50: #{tpu_custom_call.1} parent=1 // pred_check
      _
    $region51: #{tpu_custom_call.1} parent=1 // pred_check_branch
      %1274 = sbr.rel (0) target = $region53
    $region52: #{tpu_custom_call.1} parent=1 // pred_region
      %1275 = dma.done [#allocation9], 128
    $region53: #{tpu_custom_call.1} parent=1 // pred_fallthru
      _
    // Predicated region
    $region54: #{tpu_custom_call.1} parent=1 // pred_check
      _
    $region55: #{tpu_custom_call.1} parent=1 // pred_check_branch
      %1277 = sbr.rel (0) target = $region57
    $region56: #{tpu_custom_call.1} parent=1 // pred_region
      %1278 = dma.done [#allocation9], 128
    $region57: #{tpu_custom_call.1} parent=1 // pred_fallthru
      _
    %1279 = vsyncpa [#allocation7], 1
    %1280 = vsyncpa [#allocation9], 1

</llo_original>
